<compile_context>
chip_gen: v5e
topology: v5e:2x2
jax: 0.10.0
libtpu: 0.0.40
codegen_flags: <defaults>
</compile_context>

<pallas_src>
import functools
import math

import numpy as np
import jax
import jax.numpy as jnp
from jax.experimental import pallas as pl
from jax.experimental.pallas import tpu as pltpu

NEG_INF = -1e30


def _gelu_exact(z):
    # exact (erf) GELU via Abramowitz-Stegun 7.1.26 (|erf err| <= 1.5e-7);
    # uses only exp / VPU ops, which are guaranteed to lower in Mosaic.
    u = z * (1.0 / math.sqrt(2.0))
    au = jnp.abs(u)
    t = 1.0 / (1.0 + 0.3275911 * au)
    poly = ((((1.061405429 * t - 1.453152027) * t + 1.421413741) * t
             - 0.284496736) * t + 0.254829592) * t
    erf_abs = 1.0 - poly * jnp.exp(-au * au)
    erf_u = jnp.where(u >= 0.0, erf_abs, -erf_abs)
    return 0.5 * z * (1.0 + erf_u)


# ----------------------------------------------------------------------------
# Fused kernel: spatial MHA -> post -> temporal MHA -> post, `Bb` batch
# elements per grid step, everything in VMEM.
# ----------------------------------------------------------------------------
def _fused_cst_kernel(x_ref, bias_ref, chunk_ref, headm_ref, dsel_ref,
                      sp_wqkv_ref, sp_wcomb_ref, sp_vec_ref,
                      t_wqkv_ref, t_wcomb_ref, t_vec_ref,
                      o_ref, *, Bb, T, F, C, H):
    D = F * C
    BT = Bb * T
    R = F * BT          # stacked rows, ordered (f, b, t)
    C3 = 3 * C

    x_btd = x_ref[...].reshape(BT, D).astype(jnp.float32)   # (Bb*T, D)
    chunk_mask = chunk_ref[...]                              # (F, D)  0/1
    head_exp = headm_ref[...]                                # (H, C)  0/1
    denom_sel = dsel_ref[...]                                # (H*R, C) 0/1

    def mhsa(z_btd, bias, wqkv_ref, vec_ref):
        # rows (f, b, t): keep only channel chunk f (chunk selection is folded
        # into the chunk-tiled QKV weight -> one lane-dense matmul, no slices).
        x_sel = (z_btd[None, :, :] * chunk_mask[:, None, :]).reshape(R, D)
        wqkv = wqkv_ref[...]                                 # (D, 3C), q pre-scaled
        bqkv = vec_ref[0:1, :C3]                             # (1, 3C)
        qkv = jnp.dot(x_sel, wqkv, preferred_element_type=jnp.float32) + bqkv
        q = qkv[:, 0:C]
        k = qkv[:, C:2 * C]
        v = qkv[:, 2 * C:3 * C]
        # head-stacked keys / values: block h keeps only head-h lanes
        k_cat = (k[None, :, :] * head_exp[:, None, :]).reshape(H * R, C)
        v_cat = (v[None, :, :] * head_exp[:, None, :]).reshape(H * R, C)
        # all heads' scores in one lane-dense matmul: (R, C) x (H*R, C)^T
        s = jax.lax.dot_general(q, k_cat, (((1,), (1,)), ((), ())),
                                preferred_element_type=jnp.float32) + bias
        m = jnp.max(s, axis=-1, keepdims=True)               # global row max (exact shift)
        e = jnp.exp(s - m)                                   # masked cols -> exactly 0
        o_un = jnp.dot(e, v_cat, preferred_element_type=jnp.float32)      # (R, C)
        den = jnp.dot(e, denom_sel, preferred_element_type=jnp.float32)   # (R, C) per-head
        # clamp only guards pathological cross-head underflow; every head block
        # has >=1 unmasked key in this configuration.
        inv = pl.reciprocal(jnp.maximum(den, 1e-30), approx=False)
        return o_un * inv                                    # heads already lane-concatenated

    def post(o_rows, res_btd, wcomb_ref, vec_ref):
        # folded: attention out_proj  o  '(f t) c -> t (f c)'  o  post Linear
        bias_c = vec_ref[1:2, :D]
        g = vec_ref[2:3, :D]
        beta = vec_ref[3:4, :D]
        o3 = o_rows.reshape(F, BT, C)
        z = jnp.dot(o3[0], wcomb_ref[0:C, :],
                    preferred_element_type=jnp.float32) + bias_c
        for f in range(1, F):                                # static unroll, F small
            z = z + jnp.dot(o3[f], wcomb_ref[f * C:(f + 1) * C, :],
                            preferred_element_type=jnp.float32)
        z = _gelu_exact(z)
        z = z + res_btd
        mu = jnp.mean(z, axis=-1, keepdims=True)
        var = jnp.mean((z - mu) * (z - mu), axis=-1, keepdims=True)
        zn = (z - mu) * jax.lax.rsqrt(var + 1e-5)
        return zn * g + beta

    # ---- stage 1: spatial (frequency) attention + linear/GELU/res/LN -------
    o1 = mhsa(x_btd, bias_ref[0], sp_wqkv_ref, sp_vec_ref)
    xs = post(o1, x_btd, sp_wcomb_ref, sp_vec_ref)
    # ---- stage 2: temporal attention + linear/GELU/res/LN -------------------
    o2 = mhsa(xs, bias_ref[1], t_wqkv_ref, t_vec_ref)
    out = post(o2, xs, t_wcomb_ref, t_vec_ref)

    o_ref[...] = out.reshape(Bb, T, D).astype(o_ref.dtype)


# ----------------------------------------------------------------------------
# Wrapper: constants, specs, pallas_call
# ----------------------------------------------------------------------------
def _build_constants(Bb, T, F, C, H):
    D, Dh = F * C, C // H
    BT, R = Bb * T, F * Bb * T
    HR = H * R
    # row r <-> (f, b, t):  r = f*BT + b*T + t
    r = np.arange(R)
    f_r, b_r, t_r = r // BT, (r % BT) // T, r % T
    j = np.arange(HR)
    rp = j % R
    f_k, b_k, t_k = rp // BT, (rp % BT) // T, rp % T
    same_b = b_r[:, None] == b_k[None, :]
    sp_allow = same_b & (t_r[:, None] == t_k[None, :])   # attend across f
    tp_allow = same_b & (f_r[:, None] == f_k[None, :])   # attend across t
    neg = np.float32(NEG_INF)
    bias = np.stack([np.where(sp_allow, np.float32(0.0), neg),
                     np.where(tp_allow, np.float32(0.0), neg)]).astype(np.float32)
    chunk_mask = (np.arange(D)[None, :] // C == np.arange(F)[:, None]).astype(np.float32)
    head_exp = (np.arange(C)[None, :] // Dh == np.arange(H)[:, None]).astype(np.float32)
    denom_sel = ((np.arange(C)[None, :] // Dh) == (j[:, None] // R)).astype(np.float32)
    return bias, chunk_mask, head_exp, denom_sel


def cst_attention_forward(x, kp, *, T, F, C, nb_heads, batch_block=None):
    """x: (B, T, F*C). kp: packed kernel params (see pack_kernel_params)."""
    B = x.shape[0]
    D = F * C
    H = nb_heads
    if batch_block is None:
        # default: 2 parallel grid steps (keeps both v7x TensorCores busy);
        # on single-TC parts (v5e/v6e) pass batch_block=B for one fat step.
        batch_block = B // 2 if (B % 2 == 0 and B >= 2) else B
    Bb = batch_block
    assert B % Bb == 0, "batch must be divisible by batch_block"
    grid_b = B // Bb
    BT, R = Bb * T, F * Bb * T
    HR = H * R
    # keep the (quadratic in Bb) score-bias constants well under VMEM limits
    assert 2 * R * HR * 4 <= 8 * 1024 * 1024, "batch_block too large for VMEM"
    P = kp["sp_vec"].shape[1]

    bias, chunk_mask, head_exp, denom_sel = _build_constants(Bb, T, F, C, H)

    kernel = functools.partial(_fused_cst_kernel, Bb=Bb, T=T, F=F, C=C, H=H)

    const_specs = [
        pl.BlockSpec((2, R, HR), lambda i: (0, 0, 0)),
        pl.BlockSpec((F, D), lambda i: (0, 0)),
        pl.BlockSpec((H, C), lambda i: (0, 0)),
        pl.BlockSpec((HR, C), lambda i: (0, 0)),
    ]

    def stage_specs():
        return [pl.BlockSpec((D, 3 * C), lambda i: (0, 0)),
                pl.BlockSpec((D, D), lambda i: (0, 0)),
                pl.BlockSpec((4, P), lambda i: (0, 0))]

    return pl.pallas_call(
        kernel,
        out_shape=jax.ShapeDtypeStruct((B, T, D), x.dtype),
        grid=(grid_b,),
        in_specs=([pl.BlockSpec((Bb, T, D), lambda i: (i, 0, 0))]
                  + const_specs + stage_specs() + stage_specs()),
        out_specs=pl.BlockSpec((Bb, T, D), lambda i: (i, 0, 0)),
        compiler_params=pltpu.CompilerParams(
            dimension_semantics=("parallel",)),
    )(x, bias, chunk_mask, head_exp, denom_sel,
      kp["sp_wqkv"], kp["sp_wcomb"], kp["sp_vec"],
      kp["t_wqkv"], kp["t_wcomb"], kp["t_vec"])


# ----------------------------------------------------------------------------
# Parameter init (deterministic; xavier_uniform weights, zero biases, LN=1/0)
# ----------------------------------------------------------------------------
def xavier_uniform(key, shape):
    fan_out, fan_in = shape
    limit = math.sqrt(6.0 / (fan_in + fan_out))
    return jax.random.uniform(key, shape, jnp.float32, -limit, limit)


def init_params(key, attn_embed_dim, temp_embed_dim):
    E, D = attn_embed_dim, temp_embed_dim
    keys = jax.random.split(key, 6)
    params = {}
    for i, prefix in enumerate(("sp", "t")):
        k0, k1, k2 = keys[3 * i:3 * i + 3]
        params[prefix] = dict(
            wqkv=xavier_uniform(k0, (3 * E, E)),    # in_proj_weight
            bqkv=jnp.zeros((3 * E,), jnp.float32),
            wout=xavier_uniform(k1, (E, E)),        # out_proj.weight
            bout=jnp.zeros((E,), jnp.float32),
            wlin=xavier_uniform(k2, (D, D)),        # *_linear.weight
            blin=jnp.zeros((D,), jnp.float32),
            ln_g=jnp.ones((D,), jnp.float32),
            ln_b=jnp.zeros((D,), jnp.float32),
        )
    return params


def pack_kernel_params(params, *, T, F, C, nb_heads):
    """Pack / pre-fold weights for the kernel (chunk-tiled QKV with the 1/sqrt(Dh)
    scale folded into Q, out_proj folded into the post Linear, packed vectors)."""
    D = F * C
    H = nb_heads
    Dh = C // H
    scale = 1.0 / math.sqrt(Dh)
    P = max(3 * C, D)
    kp = {}
    for prefix in ("sp", "t"):
        p = params[prefix]
        wqkv_t = p["wqkv"].T                                           # (C, 3C)  in->out
        wqkv_t = jnp.concatenate([wqkv_t[:, :C] * scale, wqkv_t[:, C:]], axis=1)
        kp[f"{prefix}_wqkv"] = jnp.tile(wqkv_t, (F, 1))                # (D, 3C) chunk-tiled
        bqkv = jnp.concatenate([p["bqkv"][:C] * scale, p["bqkv"][C:]])
        wlin_t = p["wlin"].T                                           # (D, D)  in->out
        wout_t = p["wout"].T                                           # (C, C)
        wcomb = jnp.concatenate(
            [wout_t @ wlin_t[f * C:(f + 1) * C, :] for f in range(F)], axis=0)  # (D, D)
        bias_comb = jnp.tile(p["bout"], F) @ wlin_t + p["blin"]        # (D,)
        vec = jnp.zeros((4, P), jnp.float32)
        vec = vec.at[0, :3 * C].set(bqkv)
        vec = vec.at[1, :D].set(bias_comb)
        vec = vec.at[2, :D].set(p["ln_g"])
        vec = vec.at[3, :D].set(p["ln_b"])
        kp[f"{prefix}_wcomb"] = wcomb
        kp[f"{prefix}_vec"] = vec
    return kp


# ----------------------------------------------------------------------------
# Pure-JAX reference (matches the PyTorch FreqAtten branch) for verification
# ----------------------------------------------------------------------------
def _gelu_ref(x):
    return 0.5 * x * (1.0 + jax.lax.erf(x / math.sqrt(2.0)))


def _layernorm(x, g, b, eps=1e-5):
    m = jnp.mean(x, axis=-1, keepdims=True)
    v = jnp.mean((x - m) ** 2, axis=-1, keepdims=True)
    return (x - m) * jax.lax.rsqrt(v + eps) * g + b


def _mha_ref(x, p, num_heads):
    N, S, E = x.shape
    Dh = E // num_heads
    qkv = x @ p["wqkv"].T + p["bqkv"]
    q, k, v = qkv[..., :E], qkv[..., E:2 * E], qkv[..., 2 * E:]
    q = q.reshape(N, S, num_heads, Dh)
    k = k.reshape(N, S, num_heads, Dh)
    v = v.reshape(N, S, num_heads, Dh)
    s = jnp.einsum("nqhd,nkhd->nhqk", q, k) / math.sqrt(Dh)
    a = jax.nn.softmax(s, axis=-1)
    o = jnp.einsum("nhqk,nkhd->nqhd", a, v).reshape(N, S, E)
    return o @ p["wout"].T + p["bout"]


def cst_attention_reference(x, params, *, B, T, F, C, nb_heads):
    D = F * C
    x_init = x
    sp = params["sp"]
    xs = _mha_ref(x_init.reshape(B * T, F, C), sp, nb_heads).reshape(B, T, D)
    xs = _gelu_ref(xs @ sp["wlin"].T + sp["blin"]) + x_init
    xs = _layernorm(xs, sp["ln_g"], sp["ln_b"])
    tp = params["t"]
    xt_in = xs.reshape(B, T, F, C).transpose(0, 2, 1, 3).reshape(B * F, T, C)
    xt = _mha_ref(xt_in, tp, nb_heads)
    xt = xt.reshape(B, F, T, C).transpose(0, 2, 1, 3).reshape(B, T, D)
    out = _gelu_ref(xt @ tp["wlin"].T + tp["blin"]) + xs
    return _layernorm(out, tp["ln_g"], tp["ln_b"])


# ----------------------------------------------------------------------------
if __name__ == "__main__":
    # C = nb_cnn2d_filt = 32 (attention embed dim), F = 4 freq bins,
    # T = 8 time steps, B = 2, temp_embed_dim = F*C = 128, nb_heads = 4.
    B, T, F, C = 2, 8, 4, 32
    nb_heads = 4
    D = F * C

    key = jax.random.PRNGKey(0)
    kx, kparam = jax.random.split(key)
    x = jax.random.normal(kx, (B, T, D), jnp.float32)
    params = init_params(kparam, attn_embed_dim=C, temp_embed_dim=D)
    kp = pack_kernel_params(params, T=T, F=F, C=C, nb_heads=nb_heads)
    ref = cst_attention_reference(x, params, B=B, T=T, F=F, C=C,
                                  nb_heads=nb_heads)

    # (a) 2 parallel grid steps (v7x: both TensorCores busy)
    fwd2 = jax.jit(functools.partial(
        cst_attention_forward, T=T, F=F, C=C, nb_heads=nb_heads, batch_block=1))
    out2 = jax.block_until_ready(fwd2(x, kp))
    # (b) whole batch folded into a single fat step (v5e/v6e single-TC optimum)
    fwd1 = jax.jit(functools.partial(
        cst_attention_forward, T=T, F=F, C=C, nb_heads=nb_heads, batch_block=B))
    out1 = jax.block_until_ready(fwd1(x, kp))

    for out in (out2, out1):
        assert out.shape == (B, T, D)
        assert bool(jnp.all(jnp.isfinite(out)))
        max_err = float(jnp.max(jnp.abs(out - ref)))
        assert max_err < 5e-3, f"mismatch vs reference: max abs err = {max_err}"
    print("KERNEL_OK")
</pallas_src>

<mosaic_0001>
module attributes {stable_mosaic.version = 11 : i64} {
  func.func @_fused_cst_kernel(%arg0: i32, %arg1: memref<1x8x128xf32, #tpu.memory_space<vmem>>, %arg2: memref<2x32x128xf32, #tpu.memory_space<vmem>>, %arg3: memref<4x128xf32, #tpu.memory_space<vmem>>, %arg4: memref<4x32xf32, #tpu.memory_space<vmem>>, %arg5: memref<128x32xf32, #tpu.memory_space<vmem>>, %arg6: memref<128x96xf32, #tpu.memory_space<vmem>>, %arg7: memref<128x128xf32, #tpu.memory_space<vmem>>, %arg8: memref<4x128xf32, #tpu.memory_space<vmem>>, %arg9: memref<128x96xf32, #tpu.memory_space<vmem>>, %arg10: memref<128x128xf32, #tpu.memory_space<vmem>>, %arg11: memref<4x128xf32, #tpu.memory_space<vmem>>, %arg12: memref<1x8x128xf32, #tpu.memory_space<vmem>>) attributes {dimension_semantics = [#tpu.dimension_semantics<parallel>], iteration_bounds = array<i64: 2>, scalar_prefetch = 0 : i64, scratch_operands = 0 : i64, tpu.core_type = #tpu.core_type<tc>, window_params = [{transform_indices = @transform_0, window_bounds = array<i64: 1, 8, 128>}, {pipeline_mode = #tpu.pipeline_mode<synchronous>, transform_indices = @transform_1, window_bounds = array<i64: 2, 32, 128>}, {pipeline_mode = #tpu.pipeline_mode<synchronous>, transform_indices = @transform_2, window_bounds = array<i64: 4, 128>}, {pipeline_mode = #tpu.pipeline_mode<synchronous>, transform_indices = @transform_3, window_bounds = array<i64: 4, 32>}, {pipeline_mode = #tpu.pipeline_mode<synchronous>, transform_indices = @transform_4, window_bounds = array<i64: 128, 32>}, {pipeline_mode = #tpu.pipeline_mode<synchronous>, transform_indices = @transform_5, window_bounds = array<i64: 128, 96>}, {pipeline_mode = #tpu.pipeline_mode<synchronous>, transform_indices = @transform_6, window_bounds = array<i64: 128, 128>}, {pipeline_mode = #tpu.pipeline_mode<synchronous>, transform_indices = @transform_7, window_bounds = array<i64: 4, 128>}, {pipeline_mode = #tpu.pipeline_mode<synchronous>, transform_indices = @transform_8, window_bounds = array<i64: 128, 96>}, {pipeline_mode = #tpu.pipeline_mode<synchronous>, transform_indices = @transform_9, window_bounds = array<i64: 128, 128>}, {pipeline_mode = #tpu.pipeline_mode<synchronous>, transform_indices = @transform_10, window_bounds = array<i64: 4, 128>}, {transform_indices = @transform_11, window_bounds = array<i64: 1, 8, 128>}]} {
    %c0 = arith.constant 0 : index
    %c0_0 = arith.constant 0 : index
    %c0_1 = arith.constant 0 : index
    %0 = vector.load %arg1[%c0, %c0_0, %c0_1] : memref<1x8x128xf32, #tpu.memory_space<vmem>>, vector<1x8x128xf32>
    %1 = vector.shape_cast %0 : vector<1x8x128xf32> to vector<8x128xf32>
    %c0_2 = arith.constant 0 : index
    %c0_3 = arith.constant 0 : index
    %2 = vector.load %arg3[%c0_2, %c0_3] : memref<4x128xf32, #tpu.memory_space<vmem>>, vector<4x128xf32>
    %c0_4 = arith.constant 0 : index
    %c0_5 = arith.constant 0 : index
    %3 = vector.load %arg4[%c0_4, %c0_5] : memref<4x32xf32, #tpu.memory_space<vmem>>, vector<4x32xf32>
    %c0_6 = arith.constant 0 : index
    %c0_7 = arith.constant 0 : index
    %4 = vector.load %arg5[%c0_6, %c0_7] : memref<128x32xf32, #tpu.memory_space<vmem>>, vector<128x32xf32>
    %c0_8 = arith.constant 0 : index
    %c0_9 = arith.constant 0 : index
    %c0_10 = arith.constant 0 : index
    %5 = vector.load %arg2[%c0_8, %c0_9, %c0_10] : memref<2x32x128xf32, #tpu.memory_space<vmem>>, vector<1x32x128xf32>
    %6 = vector.shape_cast %5 : vector<1x32x128xf32> to vector<32x128xf32>
    %7 = vector.shape_cast %1 : vector<8x128xf32> to vector<1x8x128xf32>
    %8 = vector.shape_cast %2 : vector<4x128xf32> to vector<4x1x128xf32>
    %9 = vector.broadcast %7 : vector<1x8x128xf32> to vector<4x8x128xf32>
    %10 = vector.broadcast %8 : vector<4x1x128xf32> to vector<4x8x128xf32>
    %11 = arith.mulf %9, %10 : vector<4x8x128xf32>
    %12 = vector.shape_cast %11 : vector<4x8x128xf32> to vector<32x128xf32>
    %c0_11 = arith.constant 0 : index
    %c0_12 = arith.constant 0 : index
    %13 = vector.load %arg6[%c0_11, %c0_12] : memref<128x96xf32, #tpu.memory_space<vmem>>, vector<128x96xf32>
    %c0_13 = arith.constant 0 : index
    %c0_14 = arith.constant 0 : index
    %14 = vector.load %arg8[%c0_13, %c0_14] : memref<4x128xf32, #tpu.memory_space<vmem>>, vector<1x96xf32>
    %cst = arith.constant dense<0.000000e+00> : vector<32x96xf32>
    %15 = tpu.matmul %12, %13, %cst {dimension_numbers = #tpu.dot_dimension_numbers<[1], [0], [0], [1], [0, 0, 1, 1], [], []>} : vector<32x128xf32>, vector<128x96xf32>, vector<32x96xf32> -> vector<32x96xf32>
    %16 = vector.broadcast %14 : vector<1x96xf32> to vector<32x96xf32>
    %17 = arith.addf %15, %16 : vector<32x96xf32>
    %18 = vector.extract_strided_slice %17 {offsets = [0, 0], sizes = [32, 32], strides = [1, 1]} : vector<32x96xf32> to vector<32x32xf32>
    %19 = vector.extract_strided_slice %17 {offsets = [0, 32], sizes = [32, 32], strides = [1, 1]} : vector<32x96xf32> to vector<32x32xf32>
    %20 = vector.extract_strided_slice %17 {offsets = [0, 64], sizes = [32, 32], strides = [1, 1]} : vector<32x96xf32> to vector<32x32xf32>
    %21 = vector.shape_cast %19 : vector<32x32xf32> to vector<1x32x32xf32>
    %22 = vector.shape_cast %3 : vector<4x32xf32> to vector<4x1x32xf32>
    %23 = vector.broadcast %21 : vector<1x32x32xf32> to vector<4x32x32xf32>
    %24 = vector.broadcast %22 : vector<4x1x32xf32> to vector<4x32x32xf32>
    %25 = arith.mulf %23, %24 : vector<4x32x32xf32>
    %26 = vector.shape_cast %25 : vector<4x32x32xf32> to vector<128x32xf32>
    %27 = vector.shape_cast %20 : vector<32x32xf32> to vector<1x32x32xf32>
    %28 = vector.shape_cast %3 : vector<4x32xf32> to vector<4x1x32xf32>
    %29 = vector.broadcast %27 : vector<1x32x32xf32> to vector<4x32x32xf32>
    %30 = vector.broadcast %28 : vector<4x1x32xf32> to vector<4x32x32xf32>
    %31 = arith.mulf %29, %30 : vector<4x32x32xf32>
    %32 = vector.shape_cast %31 : vector<4x32x32xf32> to vector<128x32xf32>
    %cst_15 = arith.constant dense<0.000000e+00> : vector<32x128xf32>
    %33 = tpu.matmul %18, %26, %cst_15 {dimension_numbers = #tpu.dot_dimension_numbers<[1], [1], [0], [0], [0, 0, 1, 0], [], []>} : vector<32x32xf32>, vector<128x32xf32>, vector<32x128xf32> -> vector<32x128xf32>
    %34 = arith.addf %33, %6 : vector<32x128xf32>
    %cst_16 = arith.constant dense<0xFF800000> : vector<32xf32>
    %35 = vector.multi_reduction <maximumf>, %34, %cst_16 [1] : vector<32x128xf32> to vector<32xf32>
    %36 = vector.shape_cast %35 : vector<32xf32> to vector<32x1xf32>
    %37 = vector.broadcast %36 : vector<32x1xf32> to vector<32x128xf32>
    %38 = arith.subf %34, %37 : vector<32x128xf32>
    %39 = math.exp %38 : vector<32x128xf32>
    %cst_17 = arith.constant dense<0.000000e+00> : vector<32x32xf32>
    %40 = tpu.matmul %39, %32, %cst_17 {dimension_numbers = #tpu.dot_dimension_numbers<[1], [0], [0], [1], [0, 0, 1, 1], [], []>} : vector<32x128xf32>, vector<128x32xf32>, vector<32x32xf32> -> vector<32x32xf32>
    %cst_18 = arith.constant dense<0.000000e+00> : vector<32x32xf32>
    %41 = tpu.matmul %39, %4, %cst_18 {dimension_numbers = #tpu.dot_dimension_numbers<[1], [0], [0], [1], [0, 0, 1, 1], [], []>} : vector<32x128xf32>, vector<128x32xf32>, vector<32x32xf32> -> vector<32x32xf32>
    %cst_19 = arith.constant 1.000000e-30 : f32
    %42 = vector.broadcast %cst_19 : f32 to vector<32x32xf32>
    %43 = arith.maximumf %41, %42 : vector<32x32xf32>
    %44 = tpu.reciprocal %43 : vector<32x32xf32> -> vector<32x32xf32>
    %45 = arith.mulf %40, %44 : vector<32x32xf32>
    %c1 = arith.constant 1 : index
    %c0_20 = arith.constant 0 : index
    %46 = vector.load %arg8[%c1, %c0_20] : memref<4x128xf32, #tpu.memory_space<vmem>>, vector<1x128xf32>
    %c2 = arith.constant 2 : index
    %c0_21 = arith.constant 0 : index
    %47 = vector.load %arg8[%c2, %c0_21] : memref<4x128xf32, #tpu.memory_space<vmem>>, vector<1x128xf32>
    %c3 = arith.constant 3 : index
    %c0_22 = arith.constant 0 : index
    %48 = vector.load %arg8[%c3, %c0_22] : memref<4x128xf32, #tpu.memory_space<vmem>>, vector<1x128xf32>
    %49 = vector.shape_cast %45 : vector<32x32xf32> to vector<4x8x32xf32>
    %50 = vector.extract_strided_slice %49 {offsets = [0, 0, 0], sizes = [1, 8, 32], strides = [1, 1, 1]} : vector<4x8x32xf32> to vector<1x8x32xf32>
    %51 = vector.shape_cast %50 : vector<1x8x32xf32> to vector<8x32xf32>
    %c0_23 = arith.constant 0 : index
    %c0_24 = arith.constant 0 : index
    %52 = vector.load %arg7[%c0_23, %c0_24] : memref<128x128xf32, #tpu.memory_space<vmem>>, vector<32x128xf32>
    %cst_25 = arith.constant dense<0.000000e+00> : vector<8x128xf32>
    %53 = tpu.matmul %51, %52, %cst_25 {dimension_numbers = #tpu.dot_dimension_numbers<[1], [0], [0], [1], [0, 0, 1, 1], [], []>} : vector<8x32xf32>, vector<32x128xf32>, vector<8x128xf32> -> vector<8x128xf32>
    %54 = vector.broadcast %46 : vector<1x128xf32> to vector<8x128xf32>
    %55 = arith.addf %53, %54 : vector<8x128xf32>
    %56 = vector.extract_strided_slice %49 {offsets = [1, 0, 0], sizes = [1, 8, 32], strides = [1, 1, 1]} : vector<4x8x32xf32> to vector<1x8x32xf32>
    %57 = vector.shape_cast %56 : vector<1x8x32xf32> to vector<8x32xf32>
    %c32 = arith.constant 32 : index
    %c0_26 = arith.constant 0 : index
    %58 = vector.load %arg7[%c32, %c0_26] : memref<128x128xf32, #tpu.memory_space<vmem>>, vector<32x128xf32>
    %cst_27 = arith.constant dense<0.000000e+00> : vector<8x128xf32>
    %59 = tpu.matmul %57, %58, %cst_27 {dimension_numbers = #tpu.dot_dimension_numbers<[1], [0], [0], [1], [0, 0, 1, 1], [], []>} : vector<8x32xf32>, vector<32x128xf32>, vector<8x128xf32> -> vector<8x128xf32>
    %60 = arith.addf %55, %59 : vector<8x128xf32>
    %61 = vector.extract_strided_slice %49 {offsets = [2, 0, 0], sizes = [1, 8, 32], strides = [1, 1, 1]} : vector<4x8x32xf32> to vector<1x8x32xf32>
    %62 = vector.shape_cast %61 : vector<1x8x32xf32> to vector<8x32xf32>
    %c64 = arith.constant 64 : index
    %c0_28 = arith.constant 0 : index
    %63 = vector.load %arg7[%c64, %c0_28] : memref<128x128xf32, #tpu.memory_space<vmem>>, vector<32x128xf32>
    %cst_29 = arith.constant dense<0.000000e+00> : vector<8x128xf32>
    %64 = tpu.matmul %62, %63, %cst_29 {dimension_numbers = #tpu.dot_dimension_numbers<[1], [0], [0], [1], [0, 0, 1, 1], [], []>} : vector<8x32xf32>, vector<32x128xf32>, vector<8x128xf32> -> vector<8x128xf32>
    %65 = arith.addf %60, %64 : vector<8x128xf32>
    %66 = vector.extract_strided_slice %49 {offsets = [3, 0, 0], sizes = [1, 8, 32], strides = [1, 1, 1]} : vector<4x8x32xf32> to vector<1x8x32xf32>
    %67 = vector.shape_cast %66 : vector<1x8x32xf32> to vector<8x32xf32>
    %c96 = arith.constant 96 : index
    %c0_30 = arith.constant 0 : index
    %68 = vector.load %arg7[%c96, %c0_30] : memref<128x128xf32, #tpu.memory_space<vmem>>, vector<32x128xf32>
    %cst_31 = arith.constant dense<0.000000e+00> : vector<8x128xf32>
    %69 = tpu.matmul %67, %68, %cst_31 {dimension_numbers = #tpu.dot_dimension_numbers<[1], [0], [0], [1], [0, 0, 1, 1], [], []>} : vector<8x32xf32>, vector<32x128xf32>, vector<8x128xf32> -> vector<8x128xf32>
    %70 = arith.addf %65, %69 : vector<8x128xf32>
    %cst_32 = arith.constant 0.707106769 : f32
    %71 = vector.broadcast %cst_32 : f32 to vector<8x128xf32>
    %72 = arith.mulf %70, %71 : vector<8x128xf32>
    %73 = math.absf %72 : vector<8x128xf32>
    %cst_33 = arith.constant 0.327591091 : f32
    %74 = vector.broadcast %cst_33 : f32 to vector<8x128xf32>
    %75 = arith.mulf %74, %73 : vector<8x128xf32>
    %cst_34 = arith.constant 1.000000e+00 : f32
    %76 = vector.broadcast %cst_34 : f32 to vector<8x128xf32>
    %77 = arith.addf %76, %75 : vector<8x128xf32>
    %cst_35 = arith.constant 1.000000e+00 : f32
    %78 = vector.broadcast %cst_35 : f32 to vector<8x128xf32>
    %79 = arith.divf %78, %77 : vector<8x128xf32>
    %cst_36 = arith.constant 1.06140542 : f32
    %80 = vector.broadcast %cst_36 : f32 to vector<8x128xf32>
    %81 = arith.mulf %80, %79 : vector<8x128xf32>
    %cst_37 = arith.constant 1.45315206 : f32
    %82 = vector.broadcast %cst_37 : f32 to vector<8x128xf32>
    %83 = arith.subf %81, %82 : vector<8x128xf32>
    %84 = arith.mulf %83, %79 : vector<8x128xf32>
    %cst_38 = arith.constant 1.42141378 : f32
    %85 = vector.broadcast %cst_38 : f32 to vector<8x128xf32>
    %86 = arith.addf %84, %85 : vector<8x128xf32>
    %87 = arith.mulf %86, %79 : vector<8x128xf32>
    %cst_39 = arith.constant 0.284496725 : f32
    %88 = vector.broadcast %cst_39 : f32 to vector<8x128xf32>
    %89 = arith.subf %87, %88 : vector<8x128xf32>
    %90 = arith.mulf %89, %79 : vector<8x128xf32>
    %cst_40 = arith.constant 0.254829586 : f32
    %91 = vector.broadcast %cst_40 : f32 to vector<8x128xf32>
    %92 = arith.addf %90, %91 : vector<8x128xf32>
    %93 = arith.mulf %92, %79 : vector<8x128xf32>
    %cst_41 = arith.constant 0.000000e+00 : f32
    %94 = vector.broadcast %cst_41 : f32 to vector<8x128xf32>
    %95 = arith.subf %94, %73 : vector<8x128xf32>
    %96 = arith.mulf %95, %73 : vector<8x128xf32>
    %97 = math.exp %96 : vector<8x128xf32>
    %98 = arith.mulf %93, %97 : vector<8x128xf32>
    %cst_42 = arith.constant 1.000000e+00 : f32
    %99 = vector.broadcast %cst_42 : f32 to vector<8x128xf32>
    %100 = arith.subf %99, %98 : vector<8x128xf32>
    %cst_43 = arith.constant 0.000000e+00 : f32
    %101 = vector.broadcast %cst_43 : f32 to vector<8x128xf32>
    %102 = arith.cmpf oge, %72, %101 : vector<8x128xf32>
    %cst_44 = arith.constant 0.000000e+00 : f32
    %103 = vector.broadcast %cst_44 : f32 to vector<8x128xf32>
    %104 = arith.subf %103, %100 : vector<8x128xf32>
    %105 = arith.select %102, %100, %104 : vector<8x128xi1>, vector<8x128xf32>
    %cst_45 = arith.constant 5.000000e-01 : f32
    %106 = vector.broadcast %cst_45 : f32 to vector<8x128xf32>
    %107 = arith.mulf %106, %70 : vector<8x128xf32>
    %cst_46 = arith.constant 1.000000e+00 : f32
    %108 = vector.broadcast %cst_46 : f32 to vector<8x128xf32>
    %109 = arith.addf %108, %105 : vector<8x128xf32>
    %110 = arith.mulf %107, %109 : vector<8x128xf32>
    %111 = arith.addf %110, %1 : vector<8x128xf32>
    %cst_47 = arith.constant dense<0.000000e+00> : vector<8xf32>
    %112 = vector.multi_reduction <add>, %111, %cst_47 [1] : vector<8x128xf32> to vector<8xf32>
    %113 = vector.shape_cast %112 : vector<8xf32> to vector<8x1xf32>
    %cst_48 = arith.constant 1.280000e+02 : f32
    %114 = vector.broadcast %cst_48 : f32 to vector<8x1xf32>
    %115 = arith.divf %113, %114 : vector<8x1xf32>
    %116 = vector.broadcast %115 : vector<8x1xf32> to vector<8x128xf32>
    %117 = arith.subf %111, %116 : vector<8x128xf32>
    %118 = vector.broadcast %115 : vector<8x1xf32> to vector<8x128xf32>
    %119 = arith.subf %111, %118 : vector<8x128xf32>
    %120 = arith.mulf %117, %119 : vector<8x128xf32>
    %cst_49 = arith.constant dense<0.000000e+00> : vector<8xf32>
    %121 = vector.multi_reduction <add>, %120, %cst_49 [1] : vector<8x128xf32> to vector<8xf32>
    %122 = vector.shape_cast %121 : vector<8xf32> to vector<8x1xf32>
    %cst_50 = arith.constant 1.280000e+02 : f32
    %123 = vector.broadcast %cst_50 : f32 to vector<8x1xf32>
    %124 = arith.divf %122, %123 : vector<8x1xf32>
    %125 = vector.broadcast %115 : vector<8x1xf32> to vector<8x128xf32>
    %126 = arith.subf %111, %125 : vector<8x128xf32>
    %cst_51 = arith.constant 9.99999974E-6 : f32
    %127 = vector.broadcast %cst_51 : f32 to vector<8x1xf32>
    %128 = arith.addf %124, %127 : vector<8x1xf32>
    %129 = math.rsqrt %128 : vector<8x1xf32>
    %130 = vector.broadcast %129 : vector<8x1xf32> to vector<8x128xf32>
    %131 = arith.mulf %126, %130 : vector<8x128xf32>
    %132 = vector.broadcast %47 : vector<1x128xf32> to vector<8x128xf32>
    %133 = arith.mulf %131, %132 : vector<8x128xf32>
    %134 = vector.broadcast %48 : vector<1x128xf32> to vector<8x128xf32>
    %135 = arith.addf %133, %134 : vector<8x128xf32>
    %c1_52 = arith.constant 1 : index
    %c0_53 = arith.constant 0 : index
    %c0_54 = arith.constant 0 : index
    %136 = vector.load %arg2[%c1_52, %c0_53, %c0_54] : memref<2x32x128xf32, #tpu.memory_space<vmem>>, vector<1x32x128xf32>
    %137 = vector.shape_cast %136 : vector<1x32x128xf32> to vector<32x128xf32>
    %138 = vector.shape_cast %135 : vector<8x128xf32> to vector<1x8x128xf32>
    %139 = vector.shape_cast %2 : vector<4x128xf32> to vector<4x1x128xf32>
    %140 = vector.broadcast %138 : vector<1x8x128xf32> to vector<4x8x128xf32>
    %141 = vector.broadcast %139 : vector<4x1x128xf32> to vector<4x8x128xf32>
    %142 = arith.mulf %140, %141 : vector<4x8x128xf32>
    %143 = vector.shape_cast %142 : vector<4x8x128xf32> to vector<32x128xf32>
    %c0_55 = arith.constant 0 : index
    %c0_56 = arith.constant 0 : index
    %144 = vector.load %arg9[%c0_55, %c0_56] : memref<128x96xf32, #tpu.memory_space<vmem>>, vector<128x96xf32>
    %c0_57 = arith.constant 0 : index
    %c0_58 = arith.constant 0 : index
    %145 = vector.load %arg11[%c0_57, %c0_58] : memref<4x128xf32, #tpu.memory_space<vmem>>, vector<1x96xf32>
    %cst_59 = arith.constant dense<0.000000e+00> : vector<32x96xf32>
    %146 = tpu.matmul %143, %144, %cst_59 {dimension_numbers = #tpu.dot_dimension_numbers<[1], [0], [0], [1], [0, 0, 1, 1], [], []>} : vector<32x128xf32>, vector<128x96xf32>, vector<32x96xf32> -> vector<32x96xf32>
    %147 = vector.broadcast %145 : vector<1x96xf32> to vector<32x96xf32>
    %148 = arith.addf %146, %147 : vector<32x96xf32>
    %149 = vector.extract_strided_slice %148 {offsets = [0, 0], sizes = [32, 32], strides = [1, 1]} : vector<32x96xf32> to vector<32x32xf32>
    %150 = vector.extract_strided_slice %148 {offsets = [0, 32], sizes = [32, 32], strides = [1, 1]} : vector<32x96xf32> to vector<32x32xf32>
    %151 = vector.extract_strided_slice %148 {offsets = [0, 64], sizes = [32, 32], strides = [1, 1]} : vector<32x96xf32> to vector<32x32xf32>
    %152 = vector.shape_cast %150 : vector<32x32xf32> to vector<1x32x32xf32>
    %153 = vector.shape_cast %3 : vector<4x32xf32> to vector<4x1x32xf32>
    %154 = vector.broadcast %152 : vector<1x32x32xf32> to vector<4x32x32xf32>
    %155 = vector.broadcast %153 : vector<4x1x32xf32> to vector<4x32x32xf32>
    %156 = arith.mulf %154, %155 : vector<4x32x32xf32>
    %157 = vector.shape_cast %156 : vector<4x32x32xf32> to vector<128x32xf32>
    %158 = vector.shape_cast %151 : vector<32x32xf32> to vector<1x32x32xf32>
    %159 = vector.shape_cast %3 : vector<4x32xf32> to vector<4x1x32xf32>
    %160 = vector.broadcast %158 : vector<1x32x32xf32> to vector<4x32x32xf32>
    %161 = vector.broadcast %159 : vector<4x1x32xf32> to vector<4x32x32xf32>
    %162 = arith.mulf %160, %161 : vector<4x32x32xf32>
    %163 = vector.shape_cast %162 : vector<4x32x32xf32> to vector<128x32xf32>
    %cst_60 = arith.constant dense<0.000000e+00> : vector<32x128xf32>
    %164 = tpu.matmul %149, %157, %cst_60 {dimension_numbers = #tpu.dot_dimension_numbers<[1], [1], [0], [0], [0, 0, 1, 0], [], []>} : vector<32x32xf32>, vector<128x32xf32>, vector<32x128xf32> -> vector<32x128xf32>
    %165 = arith.addf %164, %137 : vector<32x128xf32>
    %cst_61 = arith.constant dense<0xFF800000> : vector<32xf32>
    %166 = vector.multi_reduction <maximumf>, %165, %cst_61 [1] : vector<32x128xf32> to vector<32xf32>
    %167 = vector.shape_cast %166 : vector<32xf32> to vector<32x1xf32>
    %168 = vector.broadcast %167 : vector<32x1xf32> to vector<32x128xf32>
    %169 = arith.subf %165, %168 : vector<32x128xf32>
    %170 = math.exp %169 : vector<32x128xf32>
    %cst_62 = arith.constant dense<0.000000e+00> : vector<32x32xf32>
    %171 = tpu.matmul %170, %163, %cst_62 {dimension_numbers = #tpu.dot_dimension_numbers<[1], [0], [0], [1], [0, 0, 1, 1], [], []>} : vector<32x128xf32>, vector<128x32xf32>, vector<32x32xf32> -> vector<32x32xf32>
    %cst_63 = arith.constant dense<0.000000e+00> : vector<32x32xf32>
    %172 = tpu.matmul %170, %4, %cst_63 {dimension_numbers = #tpu.dot_dimension_numbers<[1], [0], [0], [1], [0, 0, 1, 1], [], []>} : vector<32x128xf32>, vector<128x32xf32>, vector<32x32xf32> -> vector<32x32xf32>
    %cst_64 = arith.constant 1.000000e-30 : f32
    %173 = vector.broadcast %cst_64 : f32 to vector<32x32xf32>
    %174 = arith.maximumf %172, %173 : vector<32x32xf32>
    %175 = tpu.reciprocal %174 : vector<32x32xf32> -> vector<32x32xf32>
    %176 = arith.mulf %171, %175 : vector<32x32xf32>
    %c1_65 = arith.constant 1 : index
    %c0_66 = arith.constant 0 : index
    %177 = vector.load %arg11[%c1_65, %c0_66] : memref<4x128xf32, #tpu.memory_space<vmem>>, vector<1x128xf32>
    %c2_67 = arith.constant 2 : index
    %c0_68 = arith.constant 0 : index
    %178 = vector.load %arg11[%c2_67, %c0_68] : memref<4x128xf32, #tpu.memory_space<vmem>>, vector<1x128xf32>
    %c3_69 = arith.constant 3 : index
    %c0_70 = arith.constant 0 : index
    %179 = vector.load %arg11[%c3_69, %c0_70] : memref<4x128xf32, #tpu.memory_space<vmem>>, vector<1x128xf32>
    %180 = vector.shape_cast %176 : vector<32x32xf32> to vector<4x8x32xf32>
    %181 = vector.extract_strided_slice %180 {offsets = [0, 0, 0], sizes = [1, 8, 32], strides = [1, 1, 1]} : vector<4x8x32xf32> to vector<1x8x32xf32>
    %182 = vector.shape_cast %181 : vector<1x8x32xf32> to vector<8x32xf32>
    %c0_71 = arith.constant 0 : index
    %c0_72 = arith.constant 0 : index
    %183 = vector.load %arg10[%c0_71, %c0_72] : memref<128x128xf32, #tpu.memory_space<vmem>>, vector<32x128xf32>
    %cst_73 = arith.constant dense<0.000000e+00> : vector<8x128xf32>
    %184 = tpu.matmul %182, %183, %cst_73 {dimension_numbers = #tpu.dot_dimension_numbers<[1], [0], [0], [1], [0, 0, 1, 1], [], []>} : vector<8x32xf32>, vector<32x128xf32>, vector<8x128xf32> -> vector<8x128xf32>
    %185 = vector.broadcast %177 : vector<1x128xf32> to vector<8x128xf32>
    %186 = arith.addf %184, %185 : vector<8x128xf32>
    %187 = vector.extract_strided_slice %180 {offsets = [1, 0, 0], sizes = [1, 8, 32], strides = [1, 1, 1]} : vector<4x8x32xf32> to vector<1x8x32xf32>
    %188 = vector.shape_cast %187 : vector<1x8x32xf32> to vector<8x32xf32>
    %c32_74 = arith.constant 32 : index
    %c0_75 = arith.constant 0 : index
    %189 = vector.load %arg10[%c32_74, %c0_75] : memref<128x128xf32, #tpu.memory_space<vmem>>, vector<32x128xf32>
    %cst_76 = arith.constant dense<0.000000e+00> : vector<8x128xf32>
    %190 = tpu.matmul %188, %189, %cst_76 {dimension_numbers = #tpu.dot_dimension_numbers<[1], [0], [0], [1], [0, 0, 1, 1], [], []>} : vector<8x32xf32>, vector<32x128xf32>, vector<8x128xf32> -> vector<8x128xf32>
    %191 = arith.addf %186, %190 : vector<8x128xf32>
    %192 = vector.extract_strided_slice %180 {offsets = [2, 0, 0], sizes = [1, 8, 32], strides = [1, 1, 1]} : vector<4x8x32xf32> to vector<1x8x32xf32>
    %193 = vector.shape_cast %192 : vector<1x8x32xf32> to vector<8x32xf32>
    %c64_77 = arith.constant 64 : index
    %c0_78 = arith.constant 0 : index
    %194 = vector.load %arg10[%c64_77, %c0_78] : memref<128x128xf32, #tpu.memory_space<vmem>>, vector<32x128xf32>
    %cst_79 = arith.constant dense<0.000000e+00> : vector<8x128xf32>
    %195 = tpu.matmul %193, %194, %cst_79 {dimension_numbers = #tpu.dot_dimension_numbers<[1], [0], [0], [1], [0, 0, 1, 1], [], []>} : vector<8x32xf32>, vector<32x128xf32>, vector<8x128xf32> -> vector<8x128xf32>
    %196 = arith.addf %191, %195 : vector<8x128xf32>
    %197 = vector.extract_strided_slice %180 {offsets = [3, 0, 0], sizes = [1, 8, 32], strides = [1, 1, 1]} : vector<4x8x32xf32> to vector<1x8x32xf32>
    %198 = vector.shape_cast %197 : vector<1x8x32xf32> to vector<8x32xf32>
    %c96_80 = arith.constant 96 : index
    %c0_81 = arith.constant 0 : index
    %199 = vector.load %arg10[%c96_80, %c0_81] : memref<128x128xf32, #tpu.memory_space<vmem>>, vector<32x128xf32>
    %cst_82 = arith.constant dense<0.000000e+00> : vector<8x128xf32>
    %200 = tpu.matmul %198, %199, %cst_82 {dimension_numbers = #tpu.dot_dimension_numbers<[1], [0], [0], [1], [0, 0, 1, 1], [], []>} : vector<8x32xf32>, vector<32x128xf32>, vector<8x128xf32> -> vector<8x128xf32>
    %201 = arith.addf %196, %200 : vector<8x128xf32>
    %cst_83 = arith.constant 0.707106769 : f32
    %202 = vector.broadcast %cst_83 : f32 to vector<8x128xf32>
    %203 = arith.mulf %201, %202 : vector<8x128xf32>
    %204 = math.absf %203 : vector<8x128xf32>
    %cst_84 = arith.constant 0.327591091 : f32
    %205 = vector.broadcast %cst_84 : f32 to vector<8x128xf32>
    %206 = arith.mulf %205, %204 : vector<8x128xf32>
    %cst_85 = arith.constant 1.000000e+00 : f32
    %207 = vector.broadcast %cst_85 : f32 to vector<8x128xf32>
    %208 = arith.addf %207, %206 : vector<8x128xf32>
    %cst_86 = arith.constant 1.000000e+00 : f32
    %209 = vector.broadcast %cst_86 : f32 to vector<8x128xf32>
    %210 = arith.divf %209, %208 : vector<8x128xf32>
    %cst_87 = arith.constant 1.06140542 : f32
    %211 = vector.broadcast %cst_87 : f32 to vector<8x128xf32>
    %212 = arith.mulf %211, %210 : vector<8x128xf32>
    %cst_88 = arith.constant 1.45315206 : f32
    %213 = vector.broadcast %cst_88 : f32 to vector<8x128xf32>
    %214 = arith.subf %212, %213 : vector<8x128xf32>
    %215 = arith.mulf %214, %210 : vector<8x128xf32>
    %cst_89 = arith.constant 1.42141378 : f32
    %216 = vector.broadcast %cst_89 : f32 to vector<8x128xf32>
    %217 = arith.addf %215, %216 : vector<8x128xf32>
    %218 = arith.mulf %217, %210 : vector<8x128xf32>
    %cst_90 = arith.constant 0.284496725 : f32
    %219 = vector.broadcast %cst_90 : f32 to vector<8x128xf32>
    %220 = arith.subf %218, %219 : vector<8x128xf32>
    %221 = arith.mulf %220, %210 : vector<8x128xf32>
    %cst_91 = arith.constant 0.254829586 : f32
    %222 = vector.broadcast %cst_91 : f32 to vector<8x128xf32>
    %223 = arith.addf %221, %222 : vector<8x128xf32>
    %224 = arith.mulf %223, %210 : vector<8x128xf32>
    %cst_92 = arith.constant 0.000000e+00 : f32
    %225 = vector.broadcast %cst_92 : f32 to vector<8x128xf32>
    %226 = arith.subf %225, %204 : vector<8x128xf32>
    %227 = arith.mulf %226, %204 : vector<8x128xf32>
    %228 = math.exp %227 : vector<8x128xf32>
    %229 = arith.mulf %224, %228 : vector<8x128xf32>
    %cst_93 = arith.constant 1.000000e+00 : f32
    %230 = vector.broadcast %cst_93 : f32 to vector<8x128xf32>
    %231 = arith.subf %230, %229 : vector<8x128xf32>
    %cst_94 = arith.constant 0.000000e+00 : f32
    %232 = vector.broadcast %cst_94 : f32 to vector<8x128xf32>
    %233 = arith.cmpf oge, %203, %232 : vector<8x128xf32>
    %cst_95 = arith.constant 0.000000e+00 : f32
    %234 = vector.broadcast %cst_95 : f32 to vector<8x128xf32>
    %235 = arith.subf %234, %231 : vector<8x128xf32>
    %236 = arith.select %233, %231, %235 : vector<8x128xi1>, vector<8x128xf32>
    %cst_96 = arith.constant 5.000000e-01 : f32
    %237 = vector.broadcast %cst_96 : f32 to vector<8x128xf32>
    %238 = arith.mulf %237, %201 : vector<8x128xf32>
    %cst_97 = arith.constant 1.000000e+00 : f32
    %239 = vector.broadcast %cst_97 : f32 to vector<8x128xf32>
    %240 = arith.addf %239, %236 : vector<8x128xf32>
    %241 = arith.mulf %238, %240 : vector<8x128xf32>
    %242 = arith.addf %241, %135 : vector<8x128xf32>
    %cst_98 = arith.constant dense<0.000000e+00> : vector<8xf32>
    %243 = vector.multi_reduction <add>, %242, %cst_98 [1] : vector<8x128xf32> to vector<8xf32>
    %244 = vector.shape_cast %243 : vector<8xf32> to vector<8x1xf32>
    %cst_99 = arith.constant 1.280000e+02 : f32
    %245 = vector.broadcast %cst_99 : f32 to vector<8x1xf32>
    %246 = arith.divf %244, %245 : vector<8x1xf32>
    %247 = vector.broadcast %246 : vector<8x1xf32> to vector<8x128xf32>
    %248 = arith.subf %242, %247 : vector<8x128xf32>
    %249 = vector.broadcast %246 : vector<8x1xf32> to vector<8x128xf32>
    %250 = arith.subf %242, %249 : vector<8x128xf32>
    %251 = arith.mulf %248, %250 : vector<8x128xf32>
    %cst_100 = arith.constant dense<0.000000e+00> : vector<8xf32>
    %252 = vector.multi_reduction <add>, %251, %cst_100 [1] : vector<8x128xf32> to vector<8xf32>
    %253 = vector.shape_cast %252 : vector<8xf32> to vector<8x1xf32>
    %cst_101 = arith.constant 1.280000e+02 : f32
    %254 = vector.broadcast %cst_101 : f32 to vector<8x1xf32>
    %255 = arith.divf %253, %254 : vector<8x1xf32>
    %256 = vector.broadcast %246 : vector<8x1xf32> to vector<8x128xf32>
    %257 = arith.subf %242, %256 : vector<8x128xf32>
    %cst_102 = arith.constant 9.99999974E-6 : f32
    %258 = vector.broadcast %cst_102 : f32 to vector<8x1xf32>
    %259 = arith.addf %255, %258 : vector<8x1xf32>
    %260 = math.rsqrt %259 : vector<8x1xf32>
    %261 = vector.broadcast %260 : vector<8x1xf32> to vector<8x128xf32>
    %262 = arith.mulf %257, %261 : vector<8x128xf32>
    %263 = vector.broadcast %178 : vector<1x128xf32> to vector<8x128xf32>
    %264 = arith.mulf %262, %263 : vector<8x128xf32>
    %265 = vector.broadcast %179 : vector<1x128xf32> to vector<8x128xf32>
    %266 = arith.addf %264, %265 : vector<8x128xf32>
    %267 = vector.shape_cast %266 : vector<8x128xf32> to vector<1x8x128xf32>
    %c0_103 = arith.constant 0 : index
    %c0_104 = arith.constant 0 : index
    %c0_105 = arith.constant 0 : index
    %268 = vector.load %arg12[%c0_103, %c0_104, %c0_105] : memref<1x8x128xf32, #tpu.memory_space<vmem>>, vector<1x8x128xf32>
    tpu.vector_store %arg12[%c0_103, %c0_104, %c0_105], %267 {strides = array<i32>} : memref<1x8x128xf32, #tpu.memory_space<vmem>>, vector<1x8x128xf32>,
    return
  }
  func.func @transform_0(%arg0: i32) -> (i32, i32, i32) {
    %c0_i32 = arith.constant 0 : i32
    %c0_i32_0 = arith.constant 0 : i32
    %c0_i32_1 = arith.constant 0 : i32
    return %arg0, %c0_i32, %c0_i32_0 : i32, i32, i32
  }
  func.func @transform_1(%arg0: i32) -> (i32, i32, i32) {
    %c0_i32 = arith.constant 0 : i32
    %c0_i32_0 = arith.constant 0 : i32
    %c0_i32_1 = arith.constant 0 : i32
    %c0_i32_2 = arith.constant 0 : i32
    return %c0_i32, %c0_i32_0, %c0_i32_1 : i32, i32, i32
  }
  func.func @transform_2(%arg0: i32) -> (i32, i32) {
    %c0_i32 = arith.constant 0 : i32
    %c0_i32_0 = arith.constant 0 : i32
    %c0_i32_1 = arith.constant 0 : i32
    return %c0_i32, %c0_i32_0 : i32, i32
  }
  func.func @transform_3(%arg0: i32) -> (i32, i32) {
    %c0_i32 = arith.constant 0 : i32
    %c0_i32_0 = arith.constant 0 : i32
    %c0_i32_1 = arith.constant 0 : i32
    return %c0_i32, %c0_i32_0 : i32, i32
  }
  func.func @transform_4(%arg0: i32) -> (i32, i32) {
    %c0_i32 = arith.constant 0 : i32
    %c0_i32_0 = arith.constant 0 : i32
    %c0_i32_1 = arith.constant 0 : i32
    return %c0_i32, %c0_i32_0 : i32, i32
  }
  func.func @transform_5(%arg0: i32) -> (i32, i32) {
    %c0_i32 = arith.constant 0 : i32
    %c0_i32_0 = arith.constant 0 : i32
    %c0_i32_1 = arith.constant 0 : i32
    return %c0_i32, %c0_i32_0 : i32, i32
  }
  func.func @transform_6(%arg0: i32) -> (i32, i32) {
    %c0_i32 = arith.constant 0 : i32
    %c0_i32_0 = arith.constant 0 : i32
    %c0_i32_1 = arith.constant 0 : i32
    return %c0_i32, %c0_i32_0 : i32, i32
  }
  func.func @transform_7(%arg0: i32) -> (i32, i32) {
    %c0_i32 = arith.constant 0 : i32
    %c0_i32_0 = arith.constant 0 : i32
    %c0_i32_1 = arith.constant 0 : i32
    return %c0_i32, %c0_i32_0 : i32, i32
  }
  func.func @transform_8(%arg0: i32) -> (i32, i32) {
    %c0_i32 = arith.constant 0 : i32
    %c0_i32_0 = arith.constant 0 : i32
    %c0_i32_1 = arith.constant 0 : i32
    return %c0_i32, %c0_i32_0 : i32, i32
  }
  func.func @transform_9(%arg0: i32) -> (i32, i32) {
    %c0_i32 = arith.constant 0 : i32
    %c0_i32_0 = arith.constant 0 : i32
    %c0_i32_1 = arith.constant 0 : i32
    return %c0_i32, %c0_i32_0 : i32, i32
  }
  func.func @transform_10(%arg0: i32) -> (i32, i32) {
    %c0_i32 = arith.constant 0 : i32
    %c0_i32_0 = arith.constant 0 : i32
    %c0_i32_1 = arith.constant 0 : i32
    return %c0_i32, %c0_i32_0 : i32, i32
  }
  func.func @transform_11(%arg0: i32) -> (i32, i32, i32) {
    %c0_i32 = arith.constant 0 : i32
    %c0_i32_0 = arith.constant 0 : i32
    %c0_i32_1 = arith.constant 0 : i32
    return %arg0, %c0_i32, %c0_i32_0 : i32, i32, i32
  }
}

</mosaic_0001>

<llo_original>
// kernel: cst_attention_forward.1
$region0: #{cst_attention_forward.1}
  #allocation0 [shape = 'u32[]', space=smem, size = 0x4, offset = 0x4, fixed_abs, tag = 'smem constant byte address 0x4 - core index']
  #allocation1 [shape = 'u32[72,128]{1,0:T(1,128)}', space=vmem, size = 0x9000, scoped, tag = 'internal scratch']
  %s0 = inlined_call_operand.vmem [shape: f32[2,8,128], index: 0, kind: input, shape index: {}]
  %s1 = inlined_call_operand.vmem [shape: f32[2,32,128], index: 1, kind: input, shape index: {}]
  %s2 = inlined_call_operand.vmem [shape: f32[4,128], index: 2, kind: input, shape index: {}]
  %s3 = inlined_call_operand.vmem [shape: f32[4,32], index: 3, kind: input, shape index: {}]
  %s4 = inlined_call_operand.hbm [shape: f32[128,32], index: 4, kind: input, shape index: {}]
  %s5 = inlined_call_operand.vmem [shape: f32[128,96], index: 5, kind: input, shape index: {}]
  %s6 = inlined_call_operand.vmem [shape: f32[128,128], index: 6, kind: input, shape index: {}]
  %s7 = inlined_call_operand.vmem [shape: f32[4,128], index: 7, kind: input, shape index: {}]
  %s8 = inlined_call_operand.vmem [shape: f32[128,96], index: 8, kind: input, shape index: {}]
  %s9 = inlined_call_operand.vmem [shape: f32[128,128], index: 9, kind: input, shape index: {}]
  %s10 = inlined_call_operand.vmem [shape: f32[4,128], index: 10, kind: input, shape index: {}]
  %s11 = inlined_call_operand.hbm [shape: f32[2,8,128], index: 11, kind: output, shape index: {}]
  %s12 = sld [smem:[#allocation0]]
  $region81: #{cst_attention_forward.1} parent=0
    _
  %s14 = ssub.s32 1, %s12
  %s15 = scalar_select 0, %s14, %s12
  $region1: #{cst_attention_forward.1} parent=0
    #allocation2 [shape = 'u8[65536]{0}', space=vmem, size = 0x10000, scoped, tag = 'input window, operand 4, single buffered']
    #allocation3 [shape = 's32[2]{0}', space=sflag, size = 0x8, scoped, tag = 'scoped memory for cst_attention_forward.1']
    #allocation4 [shape = 's32[2]{0}', space=sflag, size = 0x8, scoped, tag = 'scoped memory for cst_attention_forward.1']
    #allocation5 [shape = 'u8[8192]{0}', space=vmem, size = 0x2000, scoped, tag = 'output window, operand 0']
    %16 = vsyncpa [#allocation3], 0
    %17 = vsyncpa [#allocation4], 0
    %s18 = scalar_lea.sflag [#allocation4], 1
    %19 = vsyncpa %s18, 0
    loop: start=0, step=1, limit=4
    $region2: #{cst_attention_forward.1} parent=1 // loop_pre_header
      _
    $region3: #{cst_attention_forward.1} parent=1 // loop_header
      %s21 = sphi 0, %s25
      %p22 = scmp.ge.s32.totalorder %s21, 4
      %s31 = sphi 0, %s33
      %s34 = sphi 0, %s31
      %s35 = sphi 0, %s34
      %s51 = sphi 0, %s35
      %s55 = sphi 0, %s55
      %s57 = sphi 0, %s55
      %s58 = sphi 0, %s57
      %s72 = sphi 0, %s58
      %s76 = sphi 0, %s76
      %s78 = sphi 0, %s76
      %s79 = sphi 0, %s78
      %s93 = sphi 0, %s79
      %s97 = sphi 0, %s97
      %s99 = sphi 0, %s97
      %s100 = sphi 0, %s99
      %s114 = sphi 0, %s100
      %s118 = sphi 0, %s118
      %s120 = sphi 0, %s118
      %s121 = sphi 0, %s120
      %s135 = sphi 0, %s121
      %s139 = sphi 0, %s139
      %s141 = sphi 0, %s139
      %s142 = sphi 0, %s141
      %s156 = sphi 0, %s142
      %s160 = sphi 0, %s160
      %s162 = sphi 0, %s160
      %s163 = sphi 0, %s162
      %s177 = sphi 0, %s163
      %s181 = sphi 0, %s181
      %s183 = sphi 0, %s181
      %s184 = sphi 0, %s183
      %s198 = sphi 0, %s184
      %s202 = sphi 0, %s202
      %s204 = sphi 0, %s202
      %s205 = sphi 0, %s204
      %s219 = sphi 0, %s205
      %s223 = sphi 0, %s223
      %s225 = sphi 0, %s223
      %s226 = sphi 0, %s225
      %s240 = sphi 0, %s226
      %s244 = sphi 0, %s244
      %s246 = sphi 0, %s244
      %s247 = sphi 0, %s246
      %s261 = sphi 0, %s247
      %s267 = sphi 0, %s269
      %s270 = sphi 0, %s267
      %s271 = sphi 0, %s270
      %s287 = sphi 0, %s271
    $region4: #{cst_attention_forward.1} parent=1 // loop_header_branch
      %24 = sbr.rel (%p22) target = $region8
    $region5: #{cst_attention_forward.1} parent=1 // loop_body
      %s26 = ssub.s32 %s21, 1
      %s27 = ssub.s32 %s21, 2
      %s28 = sadd.s32 %s21, 1
      %s29 = ssub.s32 %s21, %s28
      %p30 = scmp.eq.s32.totalorder %s29, 0
      %s32 = sadd.s32 %s31, 1
      %s33 = scalar_select %p30, %s31, %s32
      %p36 = pneg %p30
      %p37 = scmp.eq.s32.totalorder %s21, 1
      %p38 = por %p36, %p37
      %p39 = scmp.ne.s32.totalorder %s31, %s34
      %p40 = scmp.eq.s32.totalorder %s21, 0
      %p41 = por %p39, %p40
      %p42 = scmp.ne.s32.totalorder %s31, %s34
      %p43 = scmp.eq.s32.totalorder %s26, 1
      %p44 = por %p42, %p43
      %p45 = scmp.ne.s32.totalorder %s34, %s35
      %p46 = scmp.eq.s32.totalorder %s26, 0
      %p47 = por %p45, %p46
      %p48 = scmp.ne.s32.totalorder %s34, %s35
      %p49 = scmp.eq.s32.totalorder %s27, 1
      %p50 = por %p48, %p49
      %p52 = scmp.ne.s32.totalorder %s35, %s51
      %p53 = scmp.eq.s32.totalorder %s27, 0
      %p54 = por %p52, %p53
      %s56 = sadd.s32 %s55, 1
      %p59 = scmp.eq.s32.totalorder %s21, 1
      %p60 = scmp.ne.s32.totalorder %s55, %s57
      %p61 = scmp.eq.s32.totalorder %s21, 0
      %p62 = por %p60, %p61
      %p63 = scmp.ne.s32.totalorder %s55, %s57
      %p64 = scmp.eq.s32.totalorder %s26, 1
      %p65 = por %p63, %p64
      %p66 = scmp.ne.s32.totalorder %s57, %s58
      %p67 = scmp.eq.s32.totalorder %s26, 0
      %p68 = por %p66, %p67
      %p69 = scmp.ne.s32.totalorder %s57, %s58
      %p70 = scmp.eq.s32.totalorder %s27, 1
      %p71 = por %p69, %p70
      %p73 = scmp.ne.s32.totalorder %s58, %s72
      %p74 = scmp.eq.s32.totalorder %s27, 0
      %p75 = por %p73, %p74
      %s77 = sadd.s32 %s76, 1
      %p80 = scmp.eq.s32.totalorder %s21, 1
      %p81 = scmp.ne.s32.totalorder %s76, %s78
      %p82 = scmp.eq.s32.totalorder %s21, 0
      %p83 = por %p81, %p82
      %p84 = scmp.ne.s32.totalorder %s76, %s78
      %p85 = scmp.eq.s32.totalorder %s26, 1
      %p86 = por %p84, %p85
      %p87 = scmp.ne.s32.totalorder %s78, %s79
      %p88 = scmp.eq.s32.totalorder %s26, 0
      %p89 = por %p87, %p88
      %p90 = scmp.ne.s32.totalorder %s78, %s79
      %p91 = scmp.eq.s32.totalorder %s27, 1
      %p92 = por %p90, %p91
      %p94 = scmp.ne.s32.totalorder %s79, %s93
      %p95 = scmp.eq.s32.totalorder %s27, 0
      %p96 = por %p94, %p95
      %s98 = sadd.s32 %s97, 1
      %p101 = scmp.eq.s32.totalorder %s21, 1
      %p102 = scmp.ne.s32.totalorder %s97, %s99
      %p103 = scmp.eq.s32.totalorder %s21, 0
      %p104 = por %p102, %p103
      %p105 = scmp.ne.s32.totalorder %s97, %s99
      %p106 = scmp.eq.s32.totalorder %s26, 1
      %p107 = por %p105, %p106
      %p108 = scmp.ne.s32.totalorder %s99, %s100
      %p109 = scmp.eq.s32.totalorder %s26, 0
      %p110 = por %p108, %p109
      %p111 = scmp.ne.s32.totalorder %s99, %s100
      %p112 = scmp.eq.s32.totalorder %s27, 1
      %p113 = por %p111, %p112
      %p115 = scmp.ne.s32.totalorder %s100, %s114
      %p116 = scmp.eq.s32.totalorder %s27, 0
      %p117 = por %p115, %p116
      %s119 = sadd.s32 %s118, 1
      %p122 = scmp.eq.s32.totalorder %s21, 1
      %p123 = scmp.ne.s32.totalorder %s118, %s120
      %p124 = scmp.eq.s32.totalorder %s21, 0
      %p125 = por %p123, %p124
      %p126 = scmp.ne.s32.totalorder %s118, %s120
      %p127 = scmp.eq.s32.totalorder %s26, 1
      %p128 = por %p126, %p127
      %p129 = scmp.ne.s32.totalorder %s120, %s121
      %p130 = scmp.eq.s32.totalorder %s26, 0
      %p131 = por %p129, %p130
      %p132 = scmp.ne.s32.totalorder %s120, %s121
      %p133 = scmp.eq.s32.totalorder %s27, 1
      %p134 = por %p132, %p133
      %p136 = scmp.ne.s32.totalorder %s121, %s135
      %p137 = scmp.eq.s32.totalorder %s27, 0
      %p138 = por %p136, %p137
      %s140 = sadd.s32 %s139, 1
      %p143 = scmp.eq.s32.totalorder %s21, 1
      %p144 = scmp.ne.s32.totalorder %s139, %s141
      %p145 = scmp.eq.s32.totalorder %s21, 0
      %p146 = por %p144, %p145
      %p147 = scmp.ne.s32.totalorder %s139, %s141
      %p148 = scmp.eq.s32.totalorder %s26, 1
      %p149 = por %p147, %p148
      %p150 = scmp.ne.s32.totalorder %s141, %s142
      %p151 = scmp.eq.s32.totalorder %s26, 0
      %p152 = por %p150, %p151
      %p153 = scmp.ne.s32.totalorder %s141, %s142
      %p154 = scmp.eq.s32.totalorder %s27, 1
      %p155 = por %p153, %p154
      %p157 = scmp.ne.s32.totalorder %s142, %s156
      %p158 = scmp.eq.s32.totalorder %s27, 0
      %p159 = por %p157, %p158
      %s161 = sadd.s32 %s160, 1
      %p164 = scmp.eq.s32.totalorder %s21, 1
      %p165 = scmp.ne.s32.totalorder %s160, %s162
      %p166 = scmp.eq.s32.totalorder %s21, 0
      %p167 = por %p165, %p166
      %p168 = scmp.ne.s32.totalorder %s160, %s162
      %p169 = scmp.eq.s32.totalorder %s26, 1
      %p170 = por %p168, %p169
      %p171 = scmp.ne.s32.totalorder %s162, %s163
      %p172 = scmp.eq.s32.totalorder %s26, 0
      %p173 = por %p171, %p172
      %p174 = scmp.ne.s32.totalorder %s162, %s163
      %p175 = scmp.eq.s32.totalorder %s27, 1
      %p176 = por %p174, %p175
      %p178 = scmp.ne.s32.totalorder %s163, %s177
      %p179 = scmp.eq.s32.totalorder %s27, 0
      %p180 = por %p178, %p179
      %s182 = sadd.s32 %s181, 1
      %p185 = scmp.eq.s32.totalorder %s21, 1
      %p186 = scmp.ne.s32.totalorder %s181, %s183
      %p187 = scmp.eq.s32.totalorder %s21, 0
      %p188 = por %p186, %p187
      %p189 = scmp.ne.s32.totalorder %s181, %s183
      %p190 = scmp.eq.s32.totalorder %s26, 1
      %p191 = por %p189, %p190
      %p192 = scmp.ne.s32.totalorder %s183, %s184
      %p193 = scmp.eq.s32.totalorder %s26, 0
      %p194 = por %p192, %p193
      %p195 = scmp.ne.s32.totalorder %s183, %s184
      %p196 = scmp.eq.s32.totalorder %s27, 1
      %p197 = por %p195, %p196
      %p199 = scmp.ne.s32.totalorder %s184, %s198
      %p200 = scmp.eq.s32.totalorder %s27, 0
      %p201 = por %p199, %p200
      %s203 = sadd.s32 %s202, 1
      %p206 = scmp.eq.s32.totalorder %s21, 1
      %p207 = scmp.ne.s32.totalorder %s202, %s204
      %p208 = scmp.eq.s32.totalorder %s21, 0
      %p209 = por %p207, %p208
      %p210 = scmp.ne.s32.totalorder %s202, %s204
      %p211 = scmp.eq.s32.totalorder %s26, 1
      %p212 = por %p210, %p211
      %p213 = scmp.ne.s32.totalorder %s204, %s205
      %p214 = scmp.eq.s32.totalorder %s26, 0
      %p215 = por %p213, %p214
      %p216 = scmp.ne.s32.totalorder %s204, %s205
      %p217 = scmp.eq.s32.totalorder %s27, 1
      %p218 = por %p216, %p217
      %p220 = scmp.ne.s32.totalorder %s205, %s219
      %p221 = scmp.eq.s32.totalorder %s27, 0
      %p222 = por %p220, %p221
      %s224 = sadd.s32 %s223, 1
      %p227 = scmp.eq.s32.totalorder %s21, 1
      %p228 = scmp.ne.s32.totalorder %s223, %s225
      %p229 = scmp.eq.s32.totalorder %s21, 0
      %p230 = por %p228, %p229
      %p231 = scmp.ne.s32.totalorder %s223, %s225
      %p232 = scmp.eq.s32.totalorder %s26, 1
      %p233 = por %p231, %p232
      %p234 = scmp.ne.s32.totalorder %s225, %s226
      %p235 = scmp.eq.s32.totalorder %s26, 0
      %p236 = por %p234, %p235
      %p237 = scmp.ne.s32.totalorder %s225, %s226
      %p238 = scmp.eq.s32.totalorder %s27, 1
      %p239 = por %p237, %p238
      %p241 = scmp.ne.s32.totalorder %s226, %s240
      %p242 = scmp.eq.s32.totalorder %s27, 0
      %p243 = por %p241, %p242
      %s245 = sadd.s32 %s244, 1
      %p248 = scmp.eq.s32.totalorder %s21, 1
      %p249 = scmp.ne.s32.totalorder %s244, %s246
      %p250 = scmp.eq.s32.totalorder %s21, 0
      %p251 = por %p249, %p250
      %p252 = scmp.ne.s32.totalorder %s244, %s246
      %p253 = scmp.eq.s32.totalorder %s26, 1
      %p254 = por %p252, %p253
      %p255 = scmp.ne.s32.totalorder %s246, %s247
      %p256 = scmp.eq.s32.totalorder %s26, 0
      %p257 = por %p255, %p256
      %p258 = scmp.ne.s32.totalorder %s246, %s247
      %p259 = scmp.eq.s32.totalorder %s27, 1
      %p260 = por %p258, %p259
      %p262 = scmp.ne.s32.totalorder %s247, %s261
      %p263 = scmp.eq.s32.totalorder %s27, 0
      %p264 = por %p262, %p263
      %s265 = ssub.s32 %s21, %s28
      %p266 = scmp.eq.s32.totalorder %s265, 0
      %s268 = sadd.s32 %s267, 1
      %s269 = scalar_select %p266, %s267, %s268
      %p272 = pneg %p266
      %p273 = scmp.eq.s32.totalorder %s21, 1
      %p274 = por %p272, %p273
      %p275 = scmp.ne.s32.totalorder %s267, %s270
      %p276 = scmp.eq.s32.totalorder %s21, 0
      %p277 = por %p275, %p276
      %p278 = scmp.ne.s32.totalorder %s267, %s270
      %p279 = scmp.eq.s32.totalorder %s26, 1
      %p280 = por %p278, %p279
      %p281 = scmp.ne.s32.totalorder %s270, %s271
      %p282 = scmp.eq.s32.totalorder %s26, 0
      %p283 = por %p281, %p282
      %p284 = scmp.ne.s32.totalorder %s270, %s271
      %p285 = scmp.eq.s32.totalorder %s27, 1
      %p286 = por %p284, %p285
      %p288 = scmp.ne.s32.totalorder %s271, %s287
      %p289 = scmp.eq.s32.totalorder %s27, 0
      %p290 = por %p288, %p289
      %p291 = scmp.le.s32.totalorder 1, %s21
      %p292 = scmp.lt.s32.totalorder %s21, 3
      %p293 = pnand %p291, %p292
      %p294 = pneg %p293
      // Predicated region
      $region9: #{cst_attention_forward.1} parent=5 // pred_check
        _
      $region10: #{cst_attention_forward.1} parent=5 // pred_check_branch
        %296 = sbr.rel (%p293) target = $region12
      $region11: #{cst_attention_forward.1} parent=5 // pred_region
        %s297 = ssub.s32 %s21, 1
        // Predicated region
        $region13: #{cst_attention_forward.1} parent=11 // pred_check
          %p298 = pneg %p68
        $region14: #{cst_attention_forward.1} parent=11 // pred_check_branch
          %300 = sbr.rel (%p298) target = $region16
        $region15: #{cst_attention_forward.1} parent=11 // pred_region
          _
        $region16: #{cst_attention_forward.1} parent=11 // pred_fallthru
          _
        // Predicated region
        $region17: #{cst_attention_forward.1} parent=11 // pred_check
          %p301 = pneg %p89
        $region18: #{cst_attention_forward.1} parent=11 // pred_check_branch
          %303 = sbr.rel (%p301) target = $region20
        $region19: #{cst_attention_forward.1} parent=11 // pred_region
          _
        $region20: #{cst_attention_forward.1} parent=11 // pred_fallthru
          _
        // Predicated region
        $region21: #{cst_attention_forward.1} parent=11 // pred_check
          %p304 = pneg %p110
        $region22: #{cst_attention_forward.1} parent=11 // pred_check_branch
          %306 = sbr.rel (%p304) target = $region24
        $region23: #{cst_attention_forward.1} parent=11 // pred_region
          _
        $region24: #{cst_attention_forward.1} parent=11 // pred_fallthru
          _
        // Predicated region
        $region25: #{cst_attention_forward.1} parent=11 // pred_check
          %p307 = pneg %p131
        $region26: #{cst_attention_forward.1} parent=11 // pred_check_branch
          %309 = sbr.rel (%p307) target = $region28
        $region27: #{cst_attention_forward.1} parent=11 // pred_region
          %311 = vsyncadd [#allocation3], 0
          %s312 = sshll.u32 %s4, 4
          %s313 = int_to_ptr.hbm [resolvable:$true] %s312
          %s314 = sshll.u32 [#allocation2], 4
          %s315 = int_to_ptr.vmem [resolvable:$true] %s314
          %320 = dma.hbm_to_vmem [thread:$0]  %s313, 2048, %s315, [#allocation3], 128, 128, 8
        $region28: #{cst_attention_forward.1} parent=11 // pred_fallthru
          _
        // Predicated region
        $region29: #{cst_attention_forward.1} parent=11 // pred_check
          %p321 = pneg %p152
        $region30: #{cst_attention_forward.1} parent=11 // pred_check_branch
          %323 = sbr.rel (%p321) target = $region32
        $region31: #{cst_attention_forward.1} parent=11 // pred_region
          _
        $region32: #{cst_attention_forward.1} parent=11 // pred_fallthru
          _
        // Predicated region
        $region33: #{cst_attention_forward.1} parent=11 // pred_check
          %p324 = pneg %p173
        $region34: #{cst_attention_forward.1} parent=11 // pred_check_branch
          %326 = sbr.rel (%p324) target = $region36
        $region35: #{cst_attention_forward.1} parent=11 // pred_region
          _
        $region36: #{cst_attention_forward.1} parent=11 // pred_fallthru
          _
        // Predicated region
        $region37: #{cst_attention_forward.1} parent=11 // pred_check
          %p327 = pneg %p194
        $region38: #{cst_attention_forward.1} parent=11 // pred_check_branch
          %329 = sbr.rel (%p327) target = $region40
        $region39: #{cst_attention_forward.1} parent=11 // pred_region
          _
        $region40: #{cst_attention_forward.1} parent=11 // pred_fallthru
          _
        // Predicated region
        $region41: #{cst_attention_forward.1} parent=11 // pred_check
          %p330 = pneg %p215
        $region42: #{cst_attention_forward.1} parent=11 // pred_check_branch
          %332 = sbr.rel (%p330) target = $region44
        $region43: #{cst_attention_forward.1} parent=11 // pred_region
          _
        $region44: #{cst_attention_forward.1} parent=11 // pred_fallthru
          _
        // Predicated region
        $region45: #{cst_attention_forward.1} parent=11 // pred_check
          %p333 = pneg %p236
        $region46: #{cst_attention_forward.1} parent=11 // pred_check_branch
          %335 = sbr.rel (%p333) target = $region48
        $region47: #{cst_attention_forward.1} parent=11 // pred_region
          _
        $region48: #{cst_attention_forward.1} parent=11 // pred_fallthru
          _
        // Predicated region
        $region49: #{cst_attention_forward.1} parent=11 // pred_check
          %p336 = pneg %p257
        $region50: #{cst_attention_forward.1} parent=11 // pred_check_branch
          %338 = sbr.rel (%p336) target = $region52
        $region51: #{cst_attention_forward.1} parent=11 // pred_region
          _
        $region52: #{cst_attention_forward.1} parent=11 // pred_fallthru
          _
      $region12: #{cst_attention_forward.1} parent=5 // pred_fallthru
        _
      %p339 = scmp.lt.s32.totalorder %s21, 2
      // Predicated region
      $region53: #{cst_attention_forward.1} parent=5 // pred_check
        %p340 = pneg %p339
      $region54: #{cst_attention_forward.1} parent=5 // pred_check_branch
        %342 = sbr.rel (%p340) target = $region56
      $region55: #{cst_attention_forward.1} parent=5 // pred_region
        // Predicated region
        $region57: #{cst_attention_forward.1} parent=55 // pred_check
          %p343 = pneg %p41
        $region58: #{cst_attention_forward.1} parent=55 // pred_check_branch
          %345 = sbr.rel (%p343) target = $region60
        $region59: #{cst_attention_forward.1} parent=55 // pred_region
          %p346 = scmp.lt.s32.totalorder %s21, 1
          %s347 = scalar_select %p346, %s21, 1
          %s348 = smul.addr %s347, 8
          %s349 = scalar_lea.vmem %s0, %s348
        $region60: #{cst_attention_forward.1} parent=55 // pred_fallthru
          _
      $region56: #{cst_attention_forward.1} parent=5 // pred_fallthru
        _
      %p350 = scmp.le.s32.totalorder 1, %s21
      %p351 = scmp.lt.s32.totalorder %s21, 3
      %p352 = pnand %p350, %p351
      %p353 = pneg %p352
      // Predicated region
      $region61: #{cst_attention_forward.1} parent=5 // pred_check
        _
      $region62: #{cst_attention_forward.1} parent=5 // pred_check_branch
        %355 = sbr.rel (%p352) target = $region64
      $region63: #{cst_attention_forward.1} parent=5 // pred_region
        %s356 = ssub.s32 %s21, 1
        // Predicated region
        $region65: #{cst_attention_forward.1} parent=63 // pred_check
          %p357 = pneg %p131
        $region66: #{cst_attention_forward.1} parent=63 // pred_check_branch
          %359 = sbr.rel (%p357) target = $region68
        $region67: #{cst_attention_forward.1} parent=63 // pred_region
          %361 = dma.done [#allocation3], 2048
        $region68: #{cst_attention_forward.1} parent=63 // pred_fallthru
          _
        %p362 = scmp.lt.s32.totalorder %s26, 1
        %s363 = scalar_select %p362, %s26, 1
        %s364 = smul.addr %s363, 8
        %s365 = scalar_lea.vmem %s0, %s364
        %p366 = pneg %p47
        %p367 = pneg %p44
        %p368 = pneg %p68
        %p369 = pneg %p65
        %p370 = pneg %p89
        %p371 = pneg %p86
        %p372 = pneg %p110
        %p373 = pneg %p107
        %p374 = pneg %p131
        %p375 = pneg %p128
        %p376 = pneg %p152
        %p377 = pneg %p149
        %p378 = pneg %p173
        %p379 = pneg %p170
        %p380 = pneg %p194
        %p381 = pneg %p191
        %p382 = pneg %p215
        %p383 = pneg %p212
        %p384 = pneg %p236
        %p385 = pneg %p233
        %p386 = pneg %p257
        %p387 = pneg %p254
        %p388 = pneg %p283
        %p389 = pneg %p280
        %s390 = sand.u32 %s270, 1
        %s391 = scalar_lea.sflag [#allocation4], %s390
        %s392 = sand.u32 %s270, 1
        %s393 = smul.addr %s392, 8
        %s394 = scalar_lea.vmem [#allocation5], %s393
        %p395 = scmp.lt.s32.totalorder %s26, 1
        %s396 = scalar_select %p395, %s26, 1
        %s397 = smul.addr %s396, 8
        %s398 = scalar_lea.vmem %s0, %s397
        %v399 = vld [vmem:[%s398] sm:$0xff]
        %v400 = vld [vmem:[%s2] sm:$0xf]
        %v401 = vld [vmem:[%s3] sm:$0xf]
        %v402 = vld [vmem:[#allocation2] sm:$0xff]
        %v403 = vld [vmem:[#allocation2 + $0x8] sm:$0xff]
        %v404 = vld [vmem:[#allocation2 + $0x10] sm:$0xff]
        %v405 = vld [vmem:[#allocation2 + $0x18] sm:$0xff]
        %v406 = vld [vmem:[#allocation2 + $0x20] sm:$0xff]
        %v407 = vld [vmem:[#allocation2 + $0x28] sm:$0xff]
        %v408 = vld [vmem:[#allocation2 + $0x30] sm:$0xff]
        %v409 = vld [vmem:[#allocation2 + $0x38] sm:$0xff]
        %v410 = vld [vmem:[#allocation2 + $0x40] sm:$0xff]
        %v411 = vld [vmem:[#allocation2 + $0x48] sm:$0xff]
        %v412 = vld [vmem:[#allocation2 + $0x50] sm:$0xff]
        %v413 = vld [vmem:[#allocation2 + $0x58] sm:$0xff]
        %v414 = vld [vmem:[#allocation2 + $0x60] sm:$0xff]
        %v415 = vld [vmem:[#allocation2 + $0x68] sm:$0xff]
        %v416 = vld [vmem:[#allocation2 + $0x70] sm:$0xff]
        %v417 = vld [vmem:[#allocation2 + $0x78] sm:$0xff]
        %v418 = vld [vmem:[%s1] sm:$0xff]
        %v419 = vld [vmem:[%s1 + $0x8] sm:$0xff]
        %v420 = vld [vmem:[%s1 + $0x10] sm:$0xff]
        %v421 = vld [vmem:[%s1 + $0x18] sm:$0xff]
        %v423 = vrot.slane %v400, 1
        %v424 = vrot.slane %v400, 2
        %v425 = vrot.slane %v400, 3
        %v426 = vperm.slane %v400, 0
        %v427 = vperm.slane %v423, 0
        %v428 = vperm.slane %v424, 0
        %v429 = vperm.slane %v425, 0
        %v434 = vmul.f32 %v399, %v426
        %v435 = vmul.f32 %v399, %v427
        %v436 = vmul.f32 %v399, %v428
        %v437 = vmul.f32 %v399, %v429
        %v438 = vld [vmem:[%s5] sm:$0xff]
        %v439 = vld [vmem:[%s5 + $0x8] sm:$0xff]
        %v440 = vld [vmem:[%s5 + $0x10] sm:$0xff]
        %v441 = vld [vmem:[%s5 + $0x18] sm:$0xff]
        %v442 = vld [vmem:[%s5 + $0x20] sm:$0xff]
        %v443 = vld [vmem:[%s5 + $0x28] sm:$0xff]
        %v444 = vld [vmem:[%s5 + $0x30] sm:$0xff]
        %v445 = vld [vmem:[%s5 + $0x38] sm:$0xff]
        %v446 = vld [vmem:[%s5 + $0x40] sm:$0xff]
        %v447 = vld [vmem:[%s5 + $0x48] sm:$0xff]
        %v448 = vld [vmem:[%s5 + $0x50] sm:$0xff]
        %v449 = vld [vmem:[%s5 + $0x58] sm:$0xff]
        %v450 = vld [vmem:[%s5 + $0x60] sm:$0xff]
        %v451 = vld [vmem:[%s5 + $0x68] sm:$0xff]
        %v452 = vld [vmem:[%s5 + $0x70] sm:$0xff]
        %v453 = vld [vmem:[%s5 + $0x78] sm:$0xff]
        %v454 = vld [vmem:[%s7] sm:$0x1]
        %v455 = vperm.slane %v454, 0
        %456 = vmatpush.msra.mxu0 %v453
        %457 = vmatpush.msra.mxu0 %v452
        %458 = vmatpush.msra.mxu0 %v451
        %459 = vmatpush.msra.mxu0 %v450
        %460 = vmatpush.msra.mxu0 %v449
        %461 = vmatpush.msra.mxu0 %v448
        %462 = vmatpush.msra.mxu0 %v447
        %463 = vmatpush.msra.mxu0 %v446
        %464 = vmatpush.msra.mxu0 %v445
        %465 = vmatpush.msra.mxu0 %v444
        %466 = vmatpush.msra.mxu0 %v443
        %467 = vmatpush.msra.mxu0 %v442
        %468 = vmatpush.msra.mxu0 %v441
        %469 = vmatpush.msra.mxu0 %v440
        %470 = vmatpush.msra.mxu0 %v439
        %471 = vmatpush.msra.mxu0 %v438
        %472 = vmatmul.f32.gmra.mxu0 %v434
        %v473 = vpop.f32.mrf.mxu0
        %v474 = vadd.f32 %v455, %v473
        %475 = vmatmul.f32.gmra.mxu0 %v435
        %v476 = vpop.f32.mrf.mxu0
        %v477 = vadd.f32 %v455, %v476
        %478 = vmatmul.f32.gmra.mxu0 %v436
        %v479 = vpop.f32.mrf.mxu0
        %v480 = vadd.f32 %v455, %v479
        %481 = vmatmul.f32.gmra.mxu0 %v437
        %v482 = vpop.f32.mrf.mxu0
        %v483 = vadd.f32 %v455, %v482
        %484 = vdwg.mxu0
        %v486 = vrot.slane %v401, 1
        %v487 = vrot.slane %v401, 2
        %v488 = vrot.slane %v401, 3
        %v489 = vperm.slane %v401, 0
        %v490 = vperm.slane %v486, 0
        %v491 = vperm.slane %v487, 0
        %v492 = vperm.slane %v488, 0
        %493 = vrot.lane.b32.xlu0 %v489, 32
        %v494 = vpop.permute.xlu0 %493
        %495 = vrot.lane.b32.xlu0 %v490, 32
        %v496 = vpop.permute.xlu0 %495
        %497 = vrot.lane.b32.xlu0 %v491, 32
        %v498 = vpop.permute.xlu0 %497
        %499 = vrot.lane.b32.xlu0 %v492, 32
        %v500 = vpop.permute.xlu0 %499
        %v505 = vmul.f32 %v474, %v494
        %v506 = vmul.f32 %v477, %v494
        %v507 = vmul.f32 %v480, %v494
        %v508 = vmul.f32 %v483, %v494
        %v509 = vmul.f32 %v474, %v496
        %v510 = vmul.f32 %v477, %v496
        %v511 = vmul.f32 %v480, %v496
        %v512 = vmul.f32 %v483, %v496
        %v513 = vmul.f32 %v474, %v498
        %v514 = vmul.f32 %v477, %v498
        %v515 = vmul.f32 %v480, %v498
        %v516 = vmul.f32 %v483, %v498
        %v517 = vmul.f32 %v474, %v500
        %v518 = vmul.f32 %v477, %v500
        %v519 = vmul.f32 %v480, %v500
        %v520 = vmul.f32 %v483, %v500
        %521 = vrot.lane.b32.xlu0 %v489, 64
        %v522 = vpop.permute.xlu0 %521
        %523 = vrot.lane.b32.xlu0 %v490, 64
        %v524 = vpop.permute.xlu0 %523
        %525 = vrot.lane.b32.xlu0 %v491, 64
        %v526 = vpop.permute.xlu0 %525
        %527 = vrot.lane.b32.xlu0 %v492, 64
        %v528 = vpop.permute.xlu0 %527
        %v533 = vmul.f32 %v474, %v522
        %v534 = vmul.f32 %v477, %v522
        %v535 = vmul.f32 %v480, %v522
        %v536 = vmul.f32 %v483, %v522
        %v537 = vmul.f32 %v474, %v524
        %v538 = vmul.f32 %v477, %v524
        %v539 = vmul.f32 %v480, %v524
        %v540 = vmul.f32 %v483, %v524
        %v541 = vmul.f32 %v474, %v526
        %v542 = vmul.f32 %v477, %v526
        %v543 = vmul.f32 %v480, %v526
        %v544 = vmul.f32 %v483, %v526
        %v545 = vmul.f32 %v474, %v528
        %v546 = vmul.f32 %v477, %v528
        %v547 = vmul.f32 %v480, %v528
        %v548 = vmul.f32 %v483, %v528
        %565 = vrot.lane.b32.xlu0 %v505, 96
        %v566 = vpop.permute.xlu0 %565
        %567 = vrot.lane.b32.xlu0 %v506, 96
        %v568 = vpop.permute.xlu0 %567
        %569 = vrot.lane.b32.xlu0 %v507, 96
        %v570 = vpop.permute.xlu0 %569
        %571 = vrot.lane.b32.xlu0 %v508, 96
        %v572 = vpop.permute.xlu0 %571
        %573 = vrot.lane.b32.xlu0 %v509, 96
        %v574 = vpop.permute.xlu0 %573
        %575 = vrot.lane.b32.xlu0 %v510, 96
        %v576 = vpop.permute.xlu0 %575
        %577 = vrot.lane.b32.xlu0 %v511, 96
        %v578 = vpop.permute.xlu0 %577
        %579 = vrot.lane.b32.xlu0 %v512, 96
        %v580 = vpop.permute.xlu0 %579
        %581 = vrot.lane.b32.xlu0 %v513, 96
        %v582 = vpop.permute.xlu0 %581
        %583 = vrot.lane.b32.xlu0 %v514, 96
        %v584 = vpop.permute.xlu0 %583
        %585 = vrot.lane.b32.xlu0 %v515, 96
        %v586 = vpop.permute.xlu0 %585
        %587 = vrot.lane.b32.xlu0 %v516, 96
        %v588 = vpop.permute.xlu0 %587
        %589 = vrot.lane.b32.xlu0 %v517, 96
        %v590 = vpop.permute.xlu0 %589
        %591 = vrot.lane.b32.xlu0 %v518, 96
        %v592 = vpop.permute.xlu0 %591
        %593 = vrot.lane.b32.xlu0 %v519, 96
        %v594 = vpop.permute.xlu0 %593
        %595 = vrot.lane.b32.xlu0 %v520, 96
        %v596 = vpop.permute.xlu0 %595
        %vm597 = vcmask 261120
        %v599 = vsel %vm597, %v474, 0
        %v602 = vsel %vm597, %v477, 0
        %v605 = vsel %vm597, %v480, 0
        %v608 = vsel %vm597, %v483, 0
        %v610 = vsel %vm597, %v566, 0
        %v612 = vsel %vm597, %v568, 0
        %v614 = vsel %vm597, %v570, 0
        %v616 = vsel %vm597, %v572, 0
        %v618 = vsel %vm597, %v574, 0
        %v620 = vsel %vm597, %v576, 0
        %v622 = vsel %vm597, %v578, 0
        %v624 = vsel %vm597, %v580, 0
        %v626 = vsel %vm597, %v582, 0
        %v628 = vsel %vm597, %v584, 0
        %v630 = vsel %vm597, %v586, 0
        %v632 = vsel %vm597, %v588, 0
        %v634 = vsel %vm597, %v590, 0
        %v636 = vsel %vm597, %v592, 0
        %v638 = vsel %vm597, %v594, 0
        %v640 = vsel %vm597, %v596, 0
        %642 = vmatpush.xpose.msra.mxu0 %v640
        %643 = vmatpush.xpose.msra.mxu0 %v638
        %644 = vmatpush.xpose.msra.mxu0 %v636
        %645 = vmatpush.xpose.msra.mxu0 %v634
        %646 = vmatpush.xpose.msra.mxu0 %v632
        %647 = vmatpush.xpose.msra.mxu0 %v630
        %648 = vmatpush.xpose.msra.mxu0 %v628
        %649 = vmatpush.xpose.msra.mxu0 %v626
        %650 = vmatpush.xpose.msra.mxu0 %v624
        %651 = vmatpush.xpose.msra.mxu0 %v622
        %652 = vmatpush.xpose.msra.mxu0 %v620
        %653 = vmatpush.xpose.msra.mxu0 %v618
        %654 = vmatpush.xpose.msra.mxu0 %v616
        %655 = vmatpush.xpose.msra.mxu0 %v614
        %656 = vmatpush.xpose.msra.mxu0 %v612
        %657 = vmatpush.xpose.msra.mxu0 %v610
        %658 = vmatmul.f32.gmra.mxu0 %v599
        %v659 = vpop.f32.mrf.mxu0
        %v660 = vadd.f32 %v418, %v659
        %661 = vmatmul.f32.gmra.mxu0 %v602
        %v662 = vpop.f32.mrf.mxu0
        %v663 = vadd.f32 %v419, %v662
        %664 = vmatmul.f32.gmra.mxu0 %v605
        %v665 = vpop.f32.mrf.mxu0
        %v666 = vadd.f32 %v420, %v665
        %667 = vmatmul.f32.gmra.mxu0 %v608
        %v668 = vpop.f32.mrf.mxu0
        %v669 = vadd.f32 %v421, %v668
        %670 = vdwg.mxu0
        %671 = vmax.xlane.f32.xlu0 %v660
        %v672 = vpop.xlane.xlu0 %671
        %673 = vmax.xlane.f32.xlu0 %v663
        %v674 = vpop.xlane.xlu0 %673
        %675 = vmax.xlane.f32.xlu0 %v666
        %v676 = vpop.xlane.xlu0 %675
        %677 = vmax.xlane.f32.xlu0 %v669
        %v678 = vpop.xlane.xlu0 %677
        %v679 = vsub.f32 %v660, %v672
        %v680 = vsub.f32 %v663, %v674
        %v681 = vsub.f32 %v666, %v676
        %v682 = vsub.f32 %v669, %v678
        %v683 = vmul.f32 %v679, 1.442695
        %v684 = vpow.pop %v683
        %v685 = vmul.f32 %v680, 1.442695
        %v686 = vpow.pop %v685
        %v687 = vmul.f32 %v681, 1.442695
        %v688 = vpow.pop %v687
        %v689 = vmul.f32 %v682, 1.442695
        %v690 = vpow.pop %v689
        %707 = vrot.lane.b32.xlu0 %v533, 64
        %v708 = vpop.permute.xlu0 %707
        %709 = vrot.lane.b32.xlu0 %v534, 64
        %v710 = vpop.permute.xlu0 %709
        %711 = vrot.lane.b32.xlu0 %v535, 64
        %v712 = vpop.permute.xlu0 %711
        %713 = vrot.lane.b32.xlu0 %v536, 64
        %v714 = vpop.permute.xlu0 %713
        %715 = vrot.lane.b32.xlu0 %v537, 64
        %v716 = vpop.permute.xlu0 %715
        %717 = vrot.lane.b32.xlu0 %v538, 64
        %v718 = vpop.permute.xlu0 %717
        %719 = vrot.lane.b32.xlu0 %v539, 64
        %v720 = vpop.permute.xlu0 %719
        %721 = vrot.lane.b32.xlu0 %v540, 64
        %v722 = vpop.permute.xlu0 %721
        %723 = vrot.lane.b32.xlu0 %v541, 64
        %v724 = vpop.permute.xlu0 %723
        %725 = vrot.lane.b32.xlu0 %v542, 64
        %v726 = vpop.permute.xlu0 %725
        %727 = vrot.lane.b32.xlu0 %v543, 64
        %v728 = vpop.permute.xlu0 %727
        %729 = vrot.lane.b32.xlu0 %v544, 64
        %v730 = vpop.permute.xlu0 %729
        %731 = vrot.lane.b32.xlu0 %v545, 64
        %v732 = vpop.permute.xlu0 %731
        %733 = vrot.lane.b32.xlu0 %v546, 64
        %v734 = vpop.permute.xlu0 %733
        %735 = vrot.lane.b32.xlu0 %v547, 64
        %v736 = vpop.permute.xlu0 %735
        %737 = vrot.lane.b32.xlu0 %v548, 64
        %v738 = vpop.permute.xlu0 %737
        %755 = vmatpush.msra.mxu0 %v738
        %756 = vmatpush.msra.mxu0 %v736
        %757 = vmatpush.msra.mxu0 %v734
        %758 = vmatpush.msra.mxu0 %v732
        %759 = vmatpush.msra.mxu0 %v730
        %760 = vmatpush.msra.mxu0 %v728
        %761 = vmatpush.msra.mxu0 %v726
        %762 = vmatpush.msra.mxu0 %v724
        %763 = vmatpush.msra.mxu0 %v722
        %764 = vmatpush.msra.mxu0 %v720
        %765 = vmatpush.msra.mxu0 %v718
        %766 = vmatpush.msra.mxu0 %v716
        %767 = vmatpush.msra.mxu0 %v714
        %768 = vmatpush.msra.mxu0 %v712
        %769 = vmatpush.msra.mxu0 %v710
        %770 = vmatpush.msra.mxu0 %v708
        %771 = vmatmul.f32.gmra.mxu0 %v684
        %v772 = vpop.f32.mrf.mxu0
        %v773 = vadd.f32 0.0, %v772
        %774 = vmatmul.f32.gmra.mxu0 %v686
        %v775 = vpop.f32.mrf.mxu0
        %v776 = vadd.f32 0.0, %v775
        %777 = vmatmul.f32.gmra.mxu0 %v688
        %v778 = vpop.f32.mrf.mxu0
        %v779 = vadd.f32 0.0, %v778
        %780 = vmatmul.f32.gmra.mxu0 %v690
        %v781 = vpop.f32.mrf.mxu0
        %v782 = vadd.f32 0.0, %v781
        %783 = vdwg.mxu0
        %784 = vmatpush.msra.mxu0 %v417
        %785 = vmatpush.msra.mxu0 %v416
        %786 = vmatpush.msra.mxu0 %v415
        %787 = vmatpush.msra.mxu0 %v414
        %788 = vmatpush.msra.mxu0 %v413
        %789 = vmatpush.msra.mxu0 %v412
        %790 = vmatpush.msra.mxu0 %v411
        %791 = vmatpush.msra.mxu0 %v410
        %792 = vmatpush.msra.mxu0 %v409
        %793 = vmatpush.msra.mxu0 %v408
        %794 = vmatpush.msra.mxu0 %v407
        %795 = vmatpush.msra.mxu0 %v406
        %796 = vmatpush.msra.mxu0 %v405
        %797 = vmatpush.msra.mxu0 %v404
        %798 = vmatpush.msra.mxu0 %v403
        %799 = vmatpush.msra.mxu0 %v402
        %800 = vmatmul.f32.gmra.mxu0 %v684
        %v801 = vpop.f32.mrf.mxu0
        %v802 = vadd.f32 0.0, %v801
        %803 = vmatmul.f32.gmra.mxu0 %v686
        %v804 = vpop.f32.mrf.mxu0
        %v805 = vadd.f32 0.0, %v804
        %806 = vmatmul.f32.gmra.mxu0 %v688
        %v807 = vpop.f32.mrf.mxu0
        %v808 = vadd.f32 0.0, %v807
        %809 = vmatmul.f32.gmra.mxu0 %v690
        %v810 = vpop.f32.mrf.mxu0
        %v811 = vadd.f32 0.0, %v810
        %812 = vdwg.mxu0
        %v813 = vmax.f32 %v802, 1e-30
        %v814 = vmax.f32 %v805, 1e-30
        %v815 = vmax.f32 %v808, 1e-30
        %v816 = vmax.f32 %v811, 1e-30
        %v817 = vrcp.pop %v813
        %v818 = vmul.f32 %v813, %v817
        %v819 = vsub.f32 1.0, %v818
        %v820 = vmul.f32 %v817, %v819
        %v821 = vadd.f32 %v817, %v820
        %vm822 = vweird.f32 %v813
        %vm823 = vweird.f32 %v817
        %vm824 = vmor %vm822, %vm823
        %v825 = vsel %vm824, %v817, %v821
        %v826 = vand.u32 2147483647, %v813
        %vm827 = vcmp.eq.f32.partialorder %v826, 8.507059e+37
        %v828 = vand.u32 %v813, 2147483648
        %v829 = vor.u32 1.1754944e-38, %v828
        %v830 = vsel %vm827, %v829, %v825
        %v831 = vrcp.pop %v814
        %v832 = vmul.f32 %v814, %v831
        %v833 = vsub.f32 1.0, %v832
        %v834 = vmul.f32 %v831, %v833
        %v835 = vadd.f32 %v831, %v834
        %vm836 = vweird.f32 %v814
        %vm837 = vweird.f32 %v831
        %vm838 = vmor %vm836, %vm837
        %v839 = vsel %vm838, %v831, %v835
        %v840 = vand.u32 2147483647, %v814
        %vm841 = vcmp.eq.f32.partialorder %v840, 8.507059e+37
        %v842 = vand.u32 %v814, 2147483648
        %v843 = vor.u32 1.1754944e-38, %v842
        %v844 = vsel %vm841, %v843, %v839
        %v845 = vrcp.pop %v815
        %v846 = vmul.f32 %v815, %v845
        %v847 = vsub.f32 1.0, %v846
        %v848 = vmul.f32 %v845, %v847
        %v849 = vadd.f32 %v845, %v848
        %vm850 = vweird.f32 %v815
        %vm851 = vweird.f32 %v845
        %vm852 = vmor %vm850, %vm851
        %v853 = vsel %vm852, %v845, %v849
        %v854 = vand.u32 2147483647, %v815
        %vm855 = vcmp.eq.f32.partialorder %v854, 8.507059e+37
        %v856 = vand.u32 %v815, 2147483648
        %v857 = vor.u32 1.1754944e-38, %v856
        %v858 = vsel %vm855, %v857, %v853
        %v859 = vrcp.pop %v816
        %v860 = vmul.f32 %v816, %v859
        %v861 = vsub.f32 1.0, %v860
        %v862 = vmul.f32 %v859, %v861
        %v863 = vadd.f32 %v859, %v862
        %vm864 = vweird.f32 %v816
        %vm865 = vweird.f32 %v859
        %vm866 = vmor %vm864, %vm865
        %v867 = vsel %vm866, %v859, %v863
        %v868 = vand.u32 2147483647, %v816
        %vm869 = vcmp.eq.f32.partialorder %v868, 8.507059e+37
        %v870 = vand.u32 %v816, 2147483648
        %v871 = vor.u32 1.1754944e-38, %v870
        %v872 = vsel %vm869, %v871, %v867
        %v873 = vmul.f32 %v773, %v830
        %v874 = vmul.f32 %v776, %v844
        %v875 = vmul.f32 %v779, %v858
        %v876 = vmul.f32 %v782, %v872
        %v877 = vld [vmem:[%s7 + $0x1] sm:$0x1]
        %v878 = vld [vmem:[%s7 + $0x2] sm:$0x1]
        %v879 = vld [vmem:[%s7 + $0x3] sm:$0x1]
        %v880 = vld [vmem:[%s6] sm:$0xff]
        %v881 = vld [vmem:[%s6 + $0x8] sm:$0xff]
        %v882 = vld [vmem:[%s6 + $0x10] sm:$0xff]
        %v883 = vld [vmem:[%s6 + $0x18] sm:$0xff]
        %v884 = vperm.slane %v877, 0
        %v886 = vsel %vm597, %v873, 0
        %888 = vmatpush.msra.mxu0 0.0
        %889 = vmatpush.msra.mxu0 0.0
        %890 = vmatpush.msra.mxu0 0.0
        %891 = vmatpush.msra.mxu0 0.0
        %892 = vmatpush.msra.mxu0 0.0
        %893 = vmatpush.msra.mxu0 0.0
        %894 = vmatpush.msra.mxu0 0.0
        %895 = vmatpush.msra.mxu0 0.0
        %896 = vmatpush.msra.mxu0 0.0
        %897 = vmatpush.msra.mxu0 0.0
        %898 = vmatpush.msra.mxu0 0.0
        %899 = vmatpush.msra.mxu0 0.0
        %900 = vmatpush.msra.mxu0 %v883
        %901 = vmatpush.msra.mxu0 %v882
        %902 = vmatpush.msra.mxu0 %v881
        %903 = vmatpush.msra.mxu0 %v880
        %904 = vmatmul.f32.gmra.mxu0 %v886
        %v905 = vpop.f32.mrf.mxu0
        %v906 = vadd.f32 %v884, %v905
        %907 = vdwg.mxu0
        %v908 = vld [vmem:[%s6 + $0x20] sm:$0xff]
        %v909 = vld [vmem:[%s6 + $0x28] sm:$0xff]
        %v910 = vld [vmem:[%s6 + $0x30] sm:$0xff]
        %v911 = vld [vmem:[%s6 + $0x38] sm:$0xff]
        %v913 = vsel %vm597, %v874, 0
        %915 = vmatpush.msra.mxu0 0.0
        %916 = vmatpush.msra.mxu0 0.0
        %917 = vmatpush.msra.mxu0 0.0
        %918 = vmatpush.msra.mxu0 0.0
        %919 = vmatpush.msra.mxu0 0.0
        %920 = vmatpush.msra.mxu0 0.0
        %921 = vmatpush.msra.mxu0 0.0
        %922 = vmatpush.msra.mxu0 0.0
        %923 = vmatpush.msra.mxu0 0.0
        %924 = vmatpush.msra.mxu0 0.0
        %925 = vmatpush.msra.mxu0 0.0
        %926 = vmatpush.msra.mxu0 0.0
        %927 = vmatpush.msra.mxu0 %v911
        %928 = vmatpush.msra.mxu0 %v910
        %929 = vmatpush.msra.mxu0 %v909
        %930 = vmatpush.msra.mxu0 %v908
        %931 = vmatmul.f32.gmra.mxu0 %v913
        %v932 = vpop.f32.mrf.mxu0
        %v933 = vadd.f32 0.0, %v932
        %934 = vdwg.mxu0
        %v935 = vadd.f32 %v906, %v933
        %v936 = vld [vmem:[%s6 + $0x40] sm:$0xff]
        %v937 = vld [vmem:[%s6 + $0x48] sm:$0xff]
        %v938 = vld [vmem:[%s6 + $0x50] sm:$0xff]
        %v939 = vld [vmem:[%s6 + $0x58] sm:$0xff]
        %v941 = vsel %vm597, %v875, 0
        %943 = vmatpush.msra.mxu0 0.0
        %944 = vmatpush.msra.mxu0 0.0
        %945 = vmatpush.msra.mxu0 0.0
        %946 = vmatpush.msra.mxu0 0.0
        %947 = vmatpush.msra.mxu0 0.0
        %948 = vmatpush.msra.mxu0 0.0
        %949 = vmatpush.msra.mxu0 0.0
        %950 = vmatpush.msra.mxu0 0.0
        %951 = vmatpush.msra.mxu0 0.0
        %952 = vmatpush.msra.mxu0 0.0
        %953 = vmatpush.msra.mxu0 0.0
        %954 = vmatpush.msra.mxu0 0.0
        %955 = vmatpush.msra.mxu0 %v939
        %956 = vmatpush.msra.mxu0 %v938
        %957 = vmatpush.msra.mxu0 %v937
        %958 = vmatpush.msra.mxu0 %v936
        %959 = vmatmul.f32.gmra.mxu0 %v941
        %v960 = vpop.f32.mrf.mxu0
        %v961 = vadd.f32 0.0, %v960
        %962 = vdwg.mxu0
        %v963 = vadd.f32 %v935, %v961
        %v964 = vld [vmem:[%s6 + $0x60] sm:$0xff]
        %v965 = vld [vmem:[%s6 + $0x68] sm:$0xff]
        %v966 = vld [vmem:[%s6 + $0x70] sm:$0xff]
        %v967 = vld [vmem:[%s6 + $0x78] sm:$0xff]
        %v969 = vsel %vm597, %v876, 0
        %971 = vmatpush.msra.mxu0 0.0
        %972 = vmatpush.msra.mxu0 0.0
        %973 = vmatpush.msra.mxu0 0.0
        %974 = vmatpush.msra.mxu0 0.0
        %975 = vmatpush.msra.mxu0 0.0
        %976 = vmatpush.msra.mxu0 0.0
        %977 = vmatpush.msra.mxu0 0.0
        %978 = vmatpush.msra.mxu0 0.0
        %979 = vmatpush.msra.mxu0 0.0
        %980 = vmatpush.msra.mxu0 0.0
        %981 = vmatpush.msra.mxu0 0.0
        %982 = vmatpush.msra.mxu0 0.0
        %983 = vmatpush.msra.mxu0 %v967
        %984 = vmatpush.msra.mxu0 %v966
        %985 = vmatpush.msra.mxu0 %v965
        %986 = vmatpush.msra.mxu0 %v964
        %987 = vmatmul.f32.gmra.mxu0 %v969
        %v988 = vpop.f32.mrf.mxu0
        %v989 = vadd.f32 0.0, %v988
        %990 = vdwg.mxu0
        %v991 = vadd.f32 %v963, %v989
        %v992 = vmul.f32 %v991, 0.70710677
        %v993 = vand.u32 2147483647, %v992
        %v994 = vmul.f32 %v993, 0.3275911
        %v995 = vadd.f32 %v994, 1.0
        %v996 = vrcp.pop %v995
        %v997 = vmul.f32 %v995, %v996
        %v998 = vsub.f32 1.0, %v997
        %v999 = vmul.f32 %v996, %v998
        %v1000 = vadd.f32 %v996, %v999
        %vm1001 = vweird.f32 %v995
        %vm1002 = vweird.f32 %v996
        %vm1003 = vmor %vm1001, %vm1002
        %v1004 = vsel %vm1003, %v996, %v1000
        %v1005 = vand.u32 2147483647, %v995
        %vm1006 = vcmp.eq.f32.partialorder %v1005, 8.507059e+37
        %v1007 = vand.u32 %v995, 2147483648
        %v1008 = vor.u32 1.1754944e-38, %v1007
        %v1009 = vsel %vm1006, %v1008, %v1004
        %v1010 = vmul.f32 1.0, %v1009
        %v1011 = vmul.f32 %v1010, 1.0614054
        %v1012 = vsub.f32 %v1011, 1.4531521
        %v1013 = vmul.f32 %v1012, %v1010
        %v1014 = vadd.f32 %v1013, 1.4214138
        %v1015 = vmul.f32 %v1014, %v1010
        %v1016 = vsub.f32 %v1015, 0.28449672
        %v1017 = vmul.f32 %v1016, %v1010
        %v1018 = vadd.f32 %v1017, 0.2548296
        %v1019 = vmul.f32 %v1018, %v1010
        %v1020 = vsub.f32 0.0, %v993
        %v1021 = vmul.f32 %v1020, %v993
        %v1022 = vmul.f32 %v1021, 1.442695
        %v1023 = vpow.pop %v1022
        %v1024 = vmul.f32 %v1019, %v1023
        %v1025 = vsub.f32 1.0, %v1024
        %vm1026 = vcmp.ge.f32.partialorder %v992, 0.0
        %v1027 = vsub.f32 0.0, %v1025
        %v1028 = vsel %vm1026, %v1025, %v1027
        %v1029 = vmul.f32 %v991, 0.5
        %v1030 = vadd.f32 %v1028, 1.0
        %v1031 = vmul.f32 %v1029, %v1030
        %v1032 = vadd.f32 %v1031, %v399
        %1033 = vadd.xlane.f32.xlu0 %v1032
        %v1034 = vpop.xlane.xlu0 %1033
        %v1035 = vrcp.pop 128.0
        %v1036 = vmul.f32 128.0, %v1035
        %v1037 = vsub.f32 1.0, %v1036
        %v1038 = vmul.f32 %v1035, %v1037
        %v1039 = vadd.f32 %v1035, %v1038
        %vm1040 = vweird.f32 %v1035
        %v1041 = vsel %vm1040, %v1035, %v1039
        %v1042 = vmul.f32 %v1034, %v1041
        %v1043 = vsub.f32 %v1032, %v1042
        %v1044 = vmul.f32 %v1043, %v1043
        %1045 = vadd.xlane.f32.xlu0 %v1044
        %v1046 = vpop.xlane.xlu0 %1045
        %v1047 = vmul.f32 %v1046, %v1041
        %v1048 = vadd.f32 %v1047, 1e-05
        %v1049 = vrsqrt.pop %v1048
        %v1050 = vmul.f32 %v1049, %v1048
        %v1051 = vmul.f32 %v1050, %v1049
        %v1052 = vmul.f32 0.5, %v1051
        %v1053 = vsub.f32 1.5, %v1052
        %v1054 = vmul.f32 %v1049, %v1053
        %vm1055 = vweird.f32 %v1048
        %vm1056 = vweird.f32 %v1049
        %vm1057 = vmor %vm1055, %vm1056
        %v1058 = vsel %vm1057, %v1049, %v1054
        %v1059 = vmul.f32 %v1043, %v1058
        %v1060 = vperm.slane %v878, 0
        %v1061 = vmul.f32 %v1059, %v1060
        %v1062 = vperm.slane %v879, 0
        %v1063 = vadd.f32 %v1061, %v1062
        %s1064 = scalar_lea.vmem %s1, 32
        %v1065 = vld [vmem:[%s1064] sm:$0xff]
        %v1066 = vld [vmem:[%s1064 + $0x8] sm:$0xff]
        %v1067 = vld [vmem:[%s1064 + $0x10] sm:$0xff]
        %v1068 = vld [vmem:[%s1064 + $0x18] sm:$0xff]
        %v1069 = vmul.f32 %v1063, %v426
        %v1070 = vmul.f32 %v1063, %v427
        %v1071 = vmul.f32 %v1063, %v428
        %v1072 = vmul.f32 %v1063, %v429
        %v1073 = vld [vmem:[%s8] sm:$0xff]
        %v1074 = vld [vmem:[%s8 + $0x8] sm:$0xff]
        %v1075 = vld [vmem:[%s8 + $0x10] sm:$0xff]
        %v1076 = vld [vmem:[%s8 + $0x18] sm:$0xff]
        %v1077 = vld [vmem:[%s8 + $0x20] sm:$0xff]
        %v1078 = vld [vmem:[%s8 + $0x28] sm:$0xff]
        %v1079 = vld [vmem:[%s8 + $0x30] sm:$0xff]
        %v1080 = vld [vmem:[%s8 + $0x38] sm:$0xff]
        %v1081 = vld [vmem:[%s8 + $0x40] sm:$0xff]
        %v1082 = vld [vmem:[%s8 + $0x48] sm:$0xff]
        %v1083 = vld [vmem:[%s8 + $0x50] sm:$0xff]
        %v1084 = vld [vmem:[%s8 + $0x58] sm:$0xff]
        %v1085 = vld [vmem:[%s8 + $0x60] sm:$0xff]
        %v1086 = vld [vmem:[%s8 + $0x68] sm:$0xff]
        %v1087 = vld [vmem:[%s8 + $0x70] sm:$0xff]
        %v1088 = vld [vmem:[%s8 + $0x78] sm:$0xff]
        %v1089 = vld [vmem:[%s10] sm:$0x1]
        %v1090 = vperm.slane %v1089, 0
        %1091 = vmatpush.msra.mxu0 %v1088
        %1092 = vmatpush.msra.mxu0 %v1087
        %1093 = vmatpush.msra.mxu0 %v1086
        %1094 = vmatpush.msra.mxu0 %v1085
        %1095 = vmatpush.msra.mxu0 %v1084
        %1096 = vmatpush.msra.mxu0 %v1083
        %1097 = vmatpush.msra.mxu0 %v1082
        %1098 = vmatpush.msra.mxu0 %v1081
        %1099 = vmatpush.msra.mxu0 %v1080
        %1100 = vmatpush.msra.mxu0 %v1079
        %1101 = vmatpush.msra.mxu0 %v1078
        %1102 = vmatpush.msra.mxu0 %v1077
        %1103 = vmatpush.msra.mxu0 %v1076
        %1104 = vmatpush.msra.mxu0 %v1075
        %1105 = vmatpush.msra.mxu0 %v1074
        %1106 = vmatpush.msra.mxu0 %v1073
        %1107 = vmatmul.f32.gmra.mxu0 %v1069
        %v1108 = vpop.f32.mrf.mxu0
        %v1109 = vadd.f32 %v1090, %v1108
        %1110 = vmatmul.f32.gmra.mxu0 %v1070
        %v1111 = vpop.f32.mrf.mxu0
        %v1112 = vadd.f32 %v1090, %v1111
        %1113 = vmatmul.f32.gmra.mxu0 %v1071
        %v1114 = vpop.f32.mrf.mxu0
        %v1115 = vadd.f32 %v1090, %v1114
        %1116 = vmatmul.f32.gmra.mxu0 %v1072
        %v1117 = vpop.f32.mrf.mxu0
        %v1118 = vadd.f32 %v1090, %v1117
        %1119 = vdwg.mxu0
        %v1120 = vmul.f32 %v1109, %v494
        %v1121 = vmul.f32 %v1112, %v494
        %v1122 = vmul.f32 %v1115, %v494
        %v1123 = vmul.f32 %v1118, %v494
        %v1124 = vmul.f32 %v1109, %v496
        %v1125 = vmul.f32 %v1112, %v496
        %v1126 = vmul.f32 %v1115, %v496
        %v1127 = vmul.f32 %v1118, %v496
        %v1128 = vmul.f32 %v1109, %v498
        %v1129 = vmul.f32 %v1112, %v498
        %v1130 = vmul.f32 %v1115, %v498
        %v1131 = vmul.f32 %v1118, %v498
        %v1132 = vmul.f32 %v1109, %v500
        %v1133 = vmul.f32 %v1112, %v500
        %v1134 = vmul.f32 %v1115, %v500
        %v1135 = vmul.f32 %v1118, %v500
        %v1136 = vmul.f32 %v1109, %v522
        %v1137 = vmul.f32 %v1112, %v522
        %v1138 = vmul.f32 %v1115, %v522
        %v1139 = vmul.f32 %v1118, %v522
        %v1140 = vmul.f32 %v1109, %v524
        %v1141 = vmul.f32 %v1112, %v524
        %v1142 = vmul.f32 %v1115, %v524
        %v1143 = vmul.f32 %v1118, %v524
        %v1144 = vmul.f32 %v1109, %v526
        %v1145 = vmul.f32 %v1112, %v526
        %v1146 = vmul.f32 %v1115, %v526
        %v1147 = vmul.f32 %v1118, %v526
        %v1148 = vmul.f32 %v1109, %v528
        %v1149 = vmul.f32 %v1112, %v528
        %v1150 = vmul.f32 %v1115, %v528
        %v1151 = vmul.f32 %v1118, %v528
        %1168 = vrot.lane.b32.xlu0 %v1120, 96
        %v1169 = vpop.permute.xlu0 %1168
        %1170 = vrot.lane.b32.xlu0 %v1121, 96
        %v1171 = vpop.permute.xlu0 %1170
        %1172 = vrot.lane.b32.xlu0 %v1122, 96
        %v1173 = vpop.permute.xlu0 %1172
        %1174 = vrot.lane.b32.xlu0 %v1123, 96
        %v1175 = vpop.permute.xlu0 %1174
        %1176 = vrot.lane.b32.xlu0 %v1124, 96
        %v1177 = vpop.permute.xlu0 %1176
        %1178 = vrot.lane.b32.xlu0 %v1125, 96
        %v1179 = vpop.permute.xlu0 %1178
        %1180 = vrot.lane.b32.xlu0 %v1126, 96
        %v1181 = vpop.permute.xlu0 %1180
        %1182 = vrot.lane.b32.xlu0 %v1127, 96
        %v1183 = vpop.permute.xlu0 %1182
        %1184 = vrot.lane.b32.xlu0 %v1128, 96
        %v1185 = vpop.permute.xlu0 %1184
        %1186 = vrot.lane.b32.xlu0 %v1129, 96
        %v1187 = vpop.permute.xlu0 %1186
        %1188 = vrot.lane.b32.xlu0 %v1130, 96
        %v1189 = vpop.permute.xlu0 %1188
        %1190 = vrot.lane.b32.xlu0 %v1131, 96
        %v1191 = vpop.permute.xlu0 %1190
        %1192 = vrot.lane.b32.xlu0 %v1132, 96
        %v1193 = vpop.permute.xlu0 %1192
        %1194 = vrot.lane.b32.xlu0 %v1133, 96
        %v1195 = vpop.permute.xlu0 %1194
        %1196 = vrot.lane.b32.xlu0 %v1134, 96
        %v1197 = vpop.permute.xlu0 %1196
        %1198 = vrot.lane.b32.xlu0 %v1135, 96
        %v1199 = vpop.permute.xlu0 %1198
        %v1201 = vsel %vm597, %v1109, 0
        %v1204 = vsel %vm597, %v1112, 0
        %v1207 = vsel %vm597, %v1115, 0
        %v1210 = vsel %vm597, %v1118, 0
        %v1212 = vsel %vm597, %v1169, 0
        %v1214 = vsel %vm597, %v1171, 0
        %v1216 = vsel %vm597, %v1173, 0
        %v1218 = vsel %vm597, %v1175, 0
        %v1220 = vsel %vm597, %v1177, 0
        %v1222 = vsel %vm597, %v1179, 0
        %v1224 = vsel %vm597, %v1181, 0
        %v1226 = vsel %vm597, %v1183, 0
        %v1228 = vsel %vm597, %v1185, 0
        %v1230 = vsel %vm597, %v1187, 0
        %v1232 = vsel %vm597, %v1189, 0
        %v1234 = vsel %vm597, %v1191, 0
        %v1236 = vsel %vm597, %v1193, 0
        %v1238 = vsel %vm597, %v1195, 0
        %v1240 = vsel %vm597, %v1197, 0
        %v1242 = vsel %vm597, %v1199, 0
        %1244 = vmatpush.xpose.msra.mxu0 %v1242
        %1245 = vmatpush.xpose.msra.mxu0 %v1240
        %1246 = vmatpush.xpose.msra.mxu0 %v1238
        %1247 = vmatpush.xpose.msra.mxu0 %v1236
        %1248 = vmatpush.xpose.msra.mxu0 %v1234
        %1249 = vmatpush.xpose.msra.mxu0 %v1232
        %1250 = vmatpush.xpose.msra.mxu0 %v1230
        %1251 = vmatpush.xpose.msra.mxu0 %v1228
        %1252 = vmatpush.xpose.msra.mxu0 %v1226
        %1253 = vmatpush.xpose.msra.mxu0 %v1224
        %1254 = vmatpush.xpose.msra.mxu0 %v1222
        %1255 = vmatpush.xpose.msra.mxu0 %v1220
        %1256 = vmatpush.xpose.msra.mxu0 %v1218
        %1257 = vmatpush.xpose.msra.mxu0 %v1216
        %1258 = vmatpush.xpose.msra.mxu0 %v1214
        %1259 = vmatpush.xpose.msra.mxu0 %v1212
        %1260 = vmatmul.f32.gmra.mxu0 %v1201
        %v1261 = vpop.f32.mrf.mxu0
        %v1262 = vadd.f32 %v1065, %v1261
        %1263 = vmatmul.f32.gmra.mxu0 %v1204
        %v1264 = vpop.f32.mrf.mxu0
        %v1265 = vadd.f32 %v1066, %v1264
        %1266 = vmatmul.f32.gmra.mxu0 %v1207
        %v1267 = vpop.f32.mrf.mxu0
        %v1268 = vadd.f32 %v1067, %v1267
        %1269 = vmatmul.f32.gmra.mxu0 %v1210
        %v1270 = vpop.f32.mrf.mxu0
        %v1271 = vadd.f32 %v1068, %v1270
        %1272 = vdwg.mxu0
        %1273 = vmax.xlane.f32.xlu0 %v1262
        %v1274 = vpop.xlane.xlu0 %1273
        %1275 = vmax.xlane.f32.xlu0 %v1265
        %v1276 = vpop.xlane.xlu0 %1275
        %1277 = vmax.xlane.f32.xlu0 %v1268
        %v1278 = vpop.xlane.xlu0 %1277
        %1279 = vmax.xlane.f32.xlu0 %v1271
        %v1280 = vpop.xlane.xlu0 %1279
        %v1281 = vsub.f32 %v1262, %v1274
        %v1282 = vsub.f32 %v1265, %v1276
        %v1283 = vsub.f32 %v1268, %v1278
        %v1284 = vsub.f32 %v1271, %v1280
        %v1285 = vmul.f32 %v1281, 1.442695
        %v1286 = vpow.pop %v1285
        %v1287 = vmul.f32 %v1282, 1.442695
        %v1288 = vpow.pop %v1287
        %v1289 = vmul.f32 %v1283, 1.442695
        %v1290 = vpow.pop %v1289
        %v1291 = vmul.f32 %v1284, 1.442695
        %v1292 = vpow.pop %v1291
        %1309 = vrot.lane.b32.xlu0 %v1136, 64
        %v1310 = vpop.permute.xlu0 %1309
        %1311 = vrot.lane.b32.xlu0 %v1137, 64
        %v1312 = vpop.permute.xlu0 %1311
        %1313 = vrot.lane.b32.xlu0 %v1138, 64
        %v1314 = vpop.permute.xlu0 %1313
        %1315 = vrot.lane.b32.xlu0 %v1139, 64
        %v1316 = vpop.permute.xlu0 %1315
        %1317 = vrot.lane.b32.xlu0 %v1140, 64
        %v1318 = vpop.permute.xlu0 %1317
        %1319 = vrot.lane.b32.xlu0 %v1141, 64
        %v1320 = vpop.permute.xlu0 %1319
        %1321 = vrot.lane.b32.xlu0 %v1142, 64
        %v1322 = vpop.permute.xlu0 %1321
        %1323 = vrot.lane.b32.xlu0 %v1143, 64
        %v1324 = vpop.permute.xlu0 %1323
        %1325 = vrot.lane.b32.xlu0 %v1144, 64
        %v1326 = vpop.permute.xlu0 %1325
        %1327 = vrot.lane.b32.xlu0 %v1145, 64
        %v1328 = vpop.permute.xlu0 %1327
        %1329 = vrot.lane.b32.xlu0 %v1146, 64
        %v1330 = vpop.permute.xlu0 %1329
        %1331 = vrot.lane.b32.xlu0 %v1147, 64
        %v1332 = vpop.permute.xlu0 %1331
        %1333 = vrot.lane.b32.xlu0 %v1148, 64
        %v1334 = vpop.permute.xlu0 %1333
        %1335 = vrot.lane.b32.xlu0 %v1149, 64
        %v1336 = vpop.permute.xlu0 %1335
        %1337 = vrot.lane.b32.xlu0 %v1150, 64
        %v1338 = vpop.permute.xlu0 %1337
        %1339 = vrot.lane.b32.xlu0 %v1151, 64
        %v1340 = vpop.permute.xlu0 %1339
        %1357 = vmatpush.msra.mxu0 %v1340
        %1358 = vmatpush.msra.mxu0 %v1338
        %1359 = vmatpush.msra.mxu0 %v1336
        %1360 = vmatpush.msra.mxu0 %v1334
        %1361 = vmatpush.msra.mxu0 %v1332
        %1362 = vmatpush.msra.mxu0 %v1330
        %1363 = vmatpush.msra.mxu0 %v1328
        %1364 = vmatpush.msra.mxu0 %v1326
        %1365 = vmatpush.msra.mxu0 %v1324
        %1366 = vmatpush.msra.mxu0 %v1322
        %1367 = vmatpush.msra.mxu0 %v1320
        %1368 = vmatpush.msra.mxu0 %v1318
        %1369 = vmatpush.msra.mxu0 %v1316
        %1370 = vmatpush.msra.mxu0 %v1314
        %1371 = vmatpush.msra.mxu0 %v1312
        %1372 = vmatpush.msra.mxu0 %v1310
        %1373 = vmatmul.f32.gmra.mxu0 %v1286
        %v1374 = vpop.f32.mrf.mxu0
        %v1375 = vadd.f32 0.0, %v1374
        %1376 = vmatmul.f32.gmra.mxu0 %v1288
        %v1377 = vpop.f32.mrf.mxu0
        %v1378 = vadd.f32 0.0, %v1377
        %1379 = vmatmul.f32.gmra.mxu0 %v1290
        %v1380 = vpop.f32.mrf.mxu0
        %v1381 = vadd.f32 0.0, %v1380
        %1382 = vmatmul.f32.gmra.mxu0 %v1292
        %v1383 = vpop.f32.mrf.mxu0
        %v1384 = vadd.f32 0.0, %v1383
        %1385 = vdwg.mxu0
        %1386 = vmatpush.msra.mxu0 %v417
        %1387 = vmatpush.msra.mxu0 %v416
        %1388 = vmatpush.msra.mxu0 %v415
        %1389 = vmatpush.msra.mxu0 %v414
        %1390 = vmatpush.msra.mxu0 %v413
        %1391 = vmatpush.msra.mxu0 %v412
        %1392 = vmatpush.msra.mxu0 %v411
        %1393 = vmatpush.msra.mxu0 %v410
        %1394 = vmatpush.msra.mxu0 %v409
        %1395 = vmatpush.msra.mxu0 %v408
        %1396 = vmatpush.msra.mxu0 %v407
        %1397 = vmatpush.msra.mxu0 %v406
        %1398 = vmatpush.msra.mxu0 %v405
        %1399 = vmatpush.msra.mxu0 %v404
        %1400 = vmatpush.msra.mxu0 %v403
        %1401 = vmatpush.msra.mxu0 %v402
        %1402 = vmatmul.f32.gmra.mxu0 %v1286
        %v1403 = vpop.f32.mrf.mxu0
        %v1404 = vadd.f32 0.0, %v1403
        %1405 = vmatmul.f32.gmra.mxu0 %v1288
        %v1406 = vpop.f32.mrf.mxu0
        %v1407 = vadd.f32 0.0, %v1406
        %1408 = vmatmul.f32.gmra.mxu0 %v1290
        %v1409 = vpop.f32.mrf.mxu0
        %v1410 = vadd.f32 0.0, %v1409
        %1411 = vmatmul.f32.gmra.mxu0 %v1292
        %v1412 = vpop.f32.mrf.mxu0
        %v1413 = vadd.f32 0.0, %v1412
        %1414 = vdwg.mxu0
        %v1415 = vmax.f32 %v1404, 1e-30
        %v1416 = vmax.f32 %v1407, 1e-30
        %v1417 = vmax.f32 %v1410, 1e-30
        %v1418 = vmax.f32 %v1413, 1e-30
        %v1419 = vrcp.pop %v1415
        %v1420 = vmul.f32 %v1415, %v1419
        %v1421 = vsub.f32 1.0, %v1420
        %v1422 = vmul.f32 %v1419, %v1421
        %v1423 = vadd.f32 %v1419, %v1422
        %vm1424 = vweird.f32 %v1415
        %vm1425 = vweird.f32 %v1419
        %vm1426 = vmor %vm1424, %vm1425
        %v1427 = vsel %vm1426, %v1419, %v1423
        %v1428 = vand.u32 2147483647, %v1415
        %vm1429 = vcmp.eq.f32.partialorder %v1428, 8.507059e+37
        %v1430 = vand.u32 %v1415, 2147483648
        %v1431 = vor.u32 1.1754944e-38, %v1430
        %v1432 = vsel %vm1429, %v1431, %v1427
        %v1433 = vrcp.pop %v1416
        %v1434 = vmul.f32 %v1416, %v1433
        %v1435 = vsub.f32 1.0, %v1434
        %v1436 = vmul.f32 %v1433, %v1435
        %v1437 = vadd.f32 %v1433, %v1436
        %vm1438 = vweird.f32 %v1416
        %vm1439 = vweird.f32 %v1433
        %vm1440 = vmor %vm1438, %vm1439
        %v1441 = vsel %vm1440, %v1433, %v1437
        %v1442 = vand.u32 2147483647, %v1416
        %vm1443 = vcmp.eq.f32.partialorder %v1442, 8.507059e+37
        %v1444 = vand.u32 %v1416, 2147483648
        %v1445 = vor.u32 1.1754944e-38, %v1444
        %v1446 = vsel %vm1443, %v1445, %v1441
        %v1447 = vrcp.pop %v1417
        %v1448 = vmul.f32 %v1417, %v1447
        %v1449 = vsub.f32 1.0, %v1448
        %v1450 = vmul.f32 %v1447, %v1449
        %v1451 = vadd.f32 %v1447, %v1450
        %vm1452 = vweird.f32 %v1417
        %vm1453 = vweird.f32 %v1447
        %vm1454 = vmor %vm1452, %vm1453
        %v1455 = vsel %vm1454, %v1447, %v1451
        %v1456 = vand.u32 2147483647, %v1417
        %vm1457 = vcmp.eq.f32.partialorder %v1456, 8.507059e+37
        %v1458 = vand.u32 %v1417, 2147483648
        %v1459 = vor.u32 1.1754944e-38, %v1458
        %v1460 = vsel %vm1457, %v1459, %v1455
        %v1461 = vrcp.pop %v1418
        %v1462 = vmul.f32 %v1418, %v1461
        %v1463 = vsub.f32 1.0, %v1462
        %v1464 = vmul.f32 %v1461, %v1463
        %v1465 = vadd.f32 %v1461, %v1464
        %vm1466 = vweird.f32 %v1418
        %vm1467 = vweird.f32 %v1461
        %vm1468 = vmor %vm1466, %vm1467
        %v1469 = vsel %vm1468, %v1461, %v1465
        %v1470 = vand.u32 2147483647, %v1418
        %vm1471 = vcmp.eq.f32.partialorder %v1470, 8.507059e+37
        %v1472 = vand.u32 %v1418, 2147483648
        %v1473 = vor.u32 1.1754944e-38, %v1472
        %v1474 = vsel %vm1471, %v1473, %v1469
        %v1475 = vmul.f32 %v1375, %v1432
        %v1476 = vmul.f32 %v1378, %v1446
        %v1477 = vmul.f32 %v1381, %v1460
        %v1478 = vmul.f32 %v1384, %v1474
        %v1479 = vld [vmem:[%s10 + $0x1] sm:$0x1]
        %v1480 = vld [vmem:[%s10 + $0x2] sm:$0x1]
        %v1481 = vld [vmem:[%s10 + $0x3] sm:$0x1]
        %v1482 = vld [vmem:[%s9] sm:$0xff]
        %v1483 = vld [vmem:[%s9 + $0x8] sm:$0xff]
        %v1484 = vld [vmem:[%s9 + $0x10] sm:$0xff]
        %v1485 = vld [vmem:[%s9 + $0x18] sm:$0xff]
        %v1486 = vperm.slane %v1479, 0
        %v1488 = vsel %vm597, %v1475, 0
        %1490 = vmatpush.msra.mxu0 0.0
        %1491 = vmatpush.msra.mxu0 0.0
        %1492 = vmatpush.msra.mxu0 0.0
        %1493 = vmatpush.msra.mxu0 0.0
        %1494 = vmatpush.msra.mxu0 0.0
        %1495 = vmatpush.msra.mxu0 0.0
        %1496 = vmatpush.msra.mxu0 0.0
        %1497 = vmatpush.msra.mxu0 0.0
        %1498 = vmatpush.msra.mxu0 0.0
        %1499 = vmatpush.msra.mxu0 0.0
        %1500 = vmatpush.msra.mxu0 0.0
        %1501 = vmatpush.msra.mxu0 0.0
        %1502 = vmatpush.msra.mxu0 %v1485
        %1503 = vmatpush.msra.mxu0 %v1484
        %1504 = vmatpush.msra.mxu0 %v1483
        %1505 = vmatpush.msra.mxu0 %v1482
        %1506 = vmatmul.f32.gmra.mxu0 %v1488
        %v1507 = vpop.f32.mrf.mxu0
        %v1508 = vadd.f32 %v1486, %v1507
        %1509 = vdwg.mxu0
        %v1510 = vld [vmem:[%s9 + $0x20] sm:$0xff]
        %v1511 = vld [vmem:[%s9 + $0x28] sm:$0xff]
        %v1512 = vld [vmem:[%s9 + $0x30] sm:$0xff]
        %v1513 = vld [vmem:[%s9 + $0x38] sm:$0xff]
        %v1515 = vsel %vm597, %v1476, 0
        %1517 = vmatpush.msra.mxu0 0.0
        %1518 = vmatpush.msra.mxu0 0.0
        %1519 = vmatpush.msra.mxu0 0.0
        %1520 = vmatpush.msra.mxu0 0.0
        %1521 = vmatpush.msra.mxu0 0.0
        %1522 = vmatpush.msra.mxu0 0.0
        %1523 = vmatpush.msra.mxu0 0.0
        %1524 = vmatpush.msra.mxu0 0.0
        %1525 = vmatpush.msra.mxu0 0.0
        %1526 = vmatpush.msra.mxu0 0.0
        %1527 = vmatpush.msra.mxu0 0.0
        %1528 = vmatpush.msra.mxu0 0.0
        %1529 = vmatpush.msra.mxu0 %v1513
        %1530 = vmatpush.msra.mxu0 %v1512
        %1531 = vmatpush.msra.mxu0 %v1511
        %1532 = vmatpush.msra.mxu0 %v1510
        %1533 = vmatmul.f32.gmra.mxu0 %v1515
        %v1534 = vpop.f32.mrf.mxu0
        %v1535 = vadd.f32 0.0, %v1534
        %1536 = vdwg.mxu0
        %v1537 = vadd.f32 %v1508, %v1535
        %v1538 = vld [vmem:[%s9 + $0x40] sm:$0xff]
        %v1539 = vld [vmem:[%s9 + $0x48] sm:$0xff]
        %v1540 = vld [vmem:[%s9 + $0x50] sm:$0xff]
        %v1541 = vld [vmem:[%s9 + $0x58] sm:$0xff]
        %v1543 = vsel %vm597, %v1477, 0
        %1545 = vmatpush.msra.mxu0 0.0
        %1546 = vmatpush.msra.mxu0 0.0
        %1547 = vmatpush.msra.mxu0 0.0
        %1548 = vmatpush.msra.mxu0 0.0
        %1549 = vmatpush.msra.mxu0 0.0
        %1550 = vmatpush.msra.mxu0 0.0
        %1551 = vmatpush.msra.mxu0 0.0
        %1552 = vmatpush.msra.mxu0 0.0
        %1553 = vmatpush.msra.mxu0 0.0
        %1554 = vmatpush.msra.mxu0 0.0
        %1555 = vmatpush.msra.mxu0 0.0
        %1556 = vmatpush.msra.mxu0 0.0
        %1557 = vmatpush.msra.mxu0 %v1541
        %1558 = vmatpush.msra.mxu0 %v1540
        %1559 = vmatpush.msra.mxu0 %v1539
        %1560 = vmatpush.msra.mxu0 %v1538
        %1561 = vmatmul.f32.gmra.mxu0 %v1543
        %v1562 = vpop.f32.mrf.mxu0
        %v1563 = vadd.f32 0.0, %v1562
        %1564 = vdwg.mxu0
        %v1565 = vadd.f32 %v1537, %v1563
        %v1566 = vld [vmem:[%s9 + $0x60] sm:$0xff]
        %v1567 = vld [vmem:[%s9 + $0x68] sm:$0xff]
        %v1568 = vld [vmem:[%s9 + $0x70] sm:$0xff]
        %v1569 = vld [vmem:[%s9 + $0x78] sm:$0xff]
        %v1571 = vsel %vm597, %v1478, 0
        %1573 = vmatpush.msra.mxu0 0.0
        %1574 = vmatpush.msra.mxu0 0.0
        %1575 = vmatpush.msra.mxu0 0.0
        %1576 = vmatpush.msra.mxu0 0.0
        %1577 = vmatpush.msra.mxu0 0.0
        %1578 = vmatpush.msra.mxu0 0.0
        %1579 = vmatpush.msra.mxu0 0.0
        %1580 = vmatpush.msra.mxu0 0.0
        %1581 = vmatpush.msra.mxu0 0.0
        %1582 = vmatpush.msra.mxu0 0.0
        %1583 = vmatpush.msra.mxu0 0.0
        %1584 = vmatpush.msra.mxu0 0.0
        %1585 = vmatpush.msra.mxu0 %v1569
        %1586 = vmatpush.msra.mxu0 %v1568
        %1587 = vmatpush.msra.mxu0 %v1567
        %1588 = vmatpush.msra.mxu0 %v1566
        %1589 = vmatmul.f32.gmra.mxu0 %v1571
        %v1590 = vpop.f32.mrf.mxu0
        %v1591 = vadd.f32 0.0, %v1590
        %1592 = vdwg.mxu0
        %v1593 = vadd.f32 %v1565, %v1591
        %v1594 = vmul.f32 %v1593, 0.70710677
        %v1595 = vand.u32 2147483647, %v1594
        %v1596 = vmul.f32 %v1595, 0.3275911
        %v1597 = vadd.f32 %v1596, 1.0
        %v1598 = vrcp.pop %v1597
        %v1599 = vmul.f32 %v1597, %v1598
        %v1600 = vsub.f32 1.0, %v1599
        %v1601 = vmul.f32 %v1598, %v1600
        %v1602 = vadd.f32 %v1598, %v1601
        %vm1603 = vweird.f32 %v1597
        %vm1604 = vweird.f32 %v1598
        %vm1605 = vmor %vm1603, %vm1604
        %v1606 = vsel %vm1605, %v1598, %v1602
        %v1607 = vand.u32 2147483647, %v1597
        %vm1608 = vcmp.eq.f32.partialorder %v1607, 8.507059e+37
        %v1609 = vand.u32 %v1597, 2147483648
        %v1610 = vor.u32 1.1754944e-38, %v1609
        %v1611 = vsel %vm1608, %v1610, %v1606
        %v1612 = vmul.f32 1.0, %v1611
        %v1613 = vmul.f32 %v1612, 1.0614054
        %v1614 = vsub.f32 %v1613, 1.4531521
        %v1615 = vmul.f32 %v1614, %v1612
        %v1616 = vadd.f32 %v1615, 1.4214138
        %v1617 = vmul.f32 %v1616, %v1612
        %v1618 = vsub.f32 %v1617, 0.28449672
        %v1619 = vmul.f32 %v1618, %v1612
        %v1620 = vadd.f32 %v1619, 0.2548296
        %v1621 = vmul.f32 %v1620, %v1612
        %v1622 = vsub.f32 0.0, %v1595
        %v1623 = vmul.f32 %v1622, %v1595
        %v1624 = vmul.f32 %v1623, 1.442695
        %v1625 = vpow.pop %v1624
        %v1626 = vmul.f32 %v1621, %v1625
        %v1627 = vsub.f32 1.0, %v1626
        %vm1628 = vcmp.ge.f32.partialorder %v1594, 0.0
        %v1629 = vsub.f32 0.0, %v1627
        %v1630 = vsel %vm1628, %v1627, %v1629
        %v1631 = vmul.f32 %v1593, 0.5
        %v1632 = vadd.f32 %v1630, 1.0
        %v1633 = vmul.f32 %v1631, %v1632
        %v1634 = vadd.f32 %v1633, %v1063
        %1635 = vadd.xlane.f32.xlu0 %v1634
        %v1636 = vpop.xlane.xlu0 %1635
        %v1637 = vmul.f32 %v1636, %v1041
        %v1638 = vsub.f32 %v1634, %v1637
        %v1639 = vmul.f32 %v1638, %v1638
        %1640 = vadd.xlane.f32.xlu0 %v1639
        %v1641 = vpop.xlane.xlu0 %1640
        %v1642 = vmul.f32 %v1641, %v1041
        %v1643 = vadd.f32 %v1642, 1e-05
        %v1644 = vrsqrt.pop %v1643
        %v1645 = vmul.f32 %v1644, %v1643
        %v1646 = vmul.f32 %v1645, %v1644
        %v1647 = vmul.f32 0.5, %v1646
        %v1648 = vsub.f32 1.5, %v1647
        %v1649 = vmul.f32 %v1644, %v1648
        %vm1650 = vweird.f32 %v1643
        %vm1651 = vweird.f32 %v1644
        %vm1652 = vmor %vm1650, %vm1651
        %v1653 = vsel %vm1652, %v1644, %v1649
        %v1654 = vmul.f32 %v1638, %v1653
        %v1655 = vperm.slane %v1480, 0
        %v1656 = vmul.f32 %v1654, %v1655
        %v1657 = vperm.slane %v1481, 0
        %v1658 = vadd.f32 %v1656, %v1657
        %1659 = vst [vmem:[%s394] sm:$0xff] %v1658
        %s1660 = sand.u32 %s270, 1
        %s1661 = scalar_lea.sflag [#allocation4], %s1660
        %s1662 = sand.u32 %s270, 1
        %s1663 = smul.addr %s1662, 8
        %s1664 = scalar_lea.vmem [#allocation5], %s1663
        // Predicated region
        $region69: #{cst_attention_forward.1} parent=63 // pred_check
          %p1665 = pneg %p280
        $region70: #{cst_attention_forward.1} parent=63 // pred_check_branch
          %1667 = sbr.rel (%p1665) target = $region72
        $region71: #{cst_attention_forward.1} parent=63 // pred_region
          %1669 = vsyncadd %s1661, 0
          %s1670 = smul.addr %s26, 8
          %s1671 = scalar_lea.hbm %s11, %s1670
          %s1673 = sshll.u32 %s1664, 4
          %s1674 = int_to_ptr.vmem [resolvable:$true] %s1673
          %s1675 = sshll.u32 %s1671, 4
          %s1676 = int_to_ptr.hbm [resolvable:$true] %s1675
          %1678 = dma.vmem_to_hbm [thread:$0]  %s1674, 128, %s1676, %s1661
        $region72: #{cst_attention_forward.1} parent=63 // pred_fallthru
          _
      $region64: #{cst_attention_forward.1} parent=5 // pred_fallthru
        _
      %p1679 = scmp.le.s32.totalorder 2, %s21
      // Predicated region
      $region73: #{cst_attention_forward.1} parent=5 // pred_check
        %p1680 = pneg %p1679
      $region74: #{cst_attention_forward.1} parent=5 // pred_check_branch
        %1682 = sbr.rel (%p1680) target = $region76
      $region75: #{cst_attention_forward.1} parent=5 // pred_region
        %s1683 = ssub.s32 %s21, 2
        // Predicated region
        $region77: #{cst_attention_forward.1} parent=75 // pred_check
          %p1684 = pneg %p286
        $region78: #{cst_attention_forward.1} parent=75 // pred_check_branch
          %1686 = sbr.rel (%p1684) target = $region80
        $region79: #{cst_attention_forward.1} parent=75 // pred_region
          %s1687 = sand.u32 %s271, 1
          %s1688 = scalar_lea.sflag [#allocation4], %s1687
          %s1689 = sand.u32 %s271, 1
          %s1690 = smul.addr %s1689, 8
          %s1691 = scalar_lea.vmem [#allocation5], %s1690
          %1693 = dma.done %s1688, 128
        $region80: #{cst_attention_forward.1} parent=75 // pred_fallthru
          _
      $region76: #{cst_attention_forward.1} parent=5 // pred_fallthru
        _
    $region6: #{cst_attention_forward.1} parent=1 // loop_footer
      %s25 = sadd.s32 1, %s21
    $region7: #{cst_attention_forward.1} parent=1 // loop_footer_branch
      %20 = sbr.rel target = $region3
    $region8: #{cst_attention_forward.1} parent=1 // loop_exit
      _
    %1694 = vsyncpa [#allocation3], 1
    %s1695 = scalar_lea.sflag [#allocation3], 1
    %1696 = vsyncpa %s1695, 1
    %1697 = vsyncpa [#allocation4], 1
    %s1698 = scalar_lea.sflag [#allocation4], 1
    %1699 = vsyncpa %s1698, 1

</llo_original>
